<compile_context>
chip_gen: v5e
topology: v5e:2x2
jax: 0.10.0
libtpu: 0.0.40
codegen_flags: <defaults>
</compile_context>

<pallas_src>
import functools

import jax
import jax.numpy as jnp
from jax import lax
from jax.experimental import pallas as pl
from jax.experimental.pallas import tpu as pltpu


def _upconv_kernel(xpad_ref, wtap_ref, b_ref, out_ref, *, th, w_in, c_out,
                   compute_dtype):
    """One (batch, row-tile) step of fused nearest-x2-up + 3x3 conv + BN + ReLU.

    xpad_ref : (1, H+2, W+2, C_in)     zero-padded low-res image (VMEM resident)
    wtap_ref : (3, 3, C_in, 4*C_out)   sub-pixel tap weights, BN scale folded
    b_ref    : (1, 4*C_out)            folded bias, tiled over (py, px)
    out_ref  : (th, 2, W, 2*C_out)     rows = low-res rows of this tile,
                                       dims = (row, py, col, px*C_out + co)
    """
    r = pl.program_id(1)
    row0 = r * th                      # first padded input row read by tap (0, .)

    acc = jnp.zeros((th * w_in, 4 * c_out), jnp.float32)
    for dr in range(3):                # static unroll: 9 taps
        for dc in range(3):
            slab = xpad_ref[0, pl.ds(row0 + dr, th), dc:dc + w_in, :]
            slab = slab.reshape(th * w_in, slab.shape[-1]).astype(compute_dtype)
            w_t = wtap_ref[dr, dc].astype(compute_dtype)     # (C_in, 4*C_out)
            acc = acc + jnp.dot(slab, w_t, preferred_element_type=jnp.float32)

    # Folded BN bias + ReLU (kept in f32 — cheap on all generations).
    acc = jnp.maximum(acc + b_ref[...], 0.0)

    for py in range(2):                # write the two output-row parities
        blk = acc[:, py * 2 * c_out:(py + 1) * 2 * c_out]
        out_ref[:, py, :, :] = blk.reshape(th, w_in, 2 * c_out).astype(out_ref.dtype)


def _fold_params(params, eps=1e-5):
    """Fold eval-mode BN into the conv and build the sub-pixel tap weights."""
    w = params["w"]                    # (C_out, C_in, 3, 3), PyTorch OIHW
    b = params["b"]
    s = params["bn_gamma"] / jnp.sqrt(params["bn_var"] + eps)
    b_fold = (b - params["bn_mean"]) * s + params["bn_beta"]

    w_hwio = jnp.transpose(w, (2, 3, 1, 0)) * s        # (3,3,C_in,C_out), BN scaled
    c_in, c_out = w_hwio.shape[2], w_hwio.shape[3]

    # B[p, o, k]: kernel row k, for output-row parity p, reads padded low-res
    # row offset o (this is where the nearest-x2 upsample gets folded away).
    B = jnp.array([[[1., 0., 0.], [0., 1., 1.], [0., 0., 0.]],
                   [[0., 0., 0.], [1., 1., 0.], [0., 0., 1.]]], w_hwio.dtype)
    # Wtap[o, e, ci, py, px, co] = sum_{k,l} B[py,o,k] B[px,e,l] w[k,l,ci,co]
    wtap = jnp.einsum("pok,qel,klic->oeipqc", B, B, w_hwio)
    wtap = wtap.reshape(3, 3, c_in, 4 * c_out)         # columns ordered (py, px, co)
    b_comb = jnp.tile(b_fold, 4).reshape(1, 4 * c_out)
    return wtap, b_comb


def _pick_row_tile(h, target):
    t = max(1, min(int(target), h))
    while h % t:
        t -= 1
    return t


@functools.partial(jax.jit, static_argnames=("row_tile", "compute_dtype"))
def up_conv_forward(x, params, row_tile=64, compute_dtype=jnp.float32):
    """up_conv forward: Upsample(x2, nearest) -> Conv3x3(p=1) -> BN(eval) -> ReLU.

    x: (N, C_in, H, W) NCHW float32.  Returns (N, C_out, 2H, 2W) NCHW.
    """
    n, c_in, h, w = x.shape
    c_out = params["w"].shape[0]
    wtap, b_comb = _fold_params(params)

    # Low-res input in NHWC with a 1-pixel zero halo (small: 1/4 of the output).
    x_nhwc = jnp.transpose(x, (0, 2, 3, 1))
    xpad = jnp.pad(x_nhwc, ((0, 0), (1, 1), (1, 1), (0, 0)))

    th = _pick_row_tile(h, row_tile)
    n_row_tiles = h // th
    grid = (n, n_row_tiles)

    flops = 2 * 9 * n * h * w * c_in * 4 * c_out
    bytes_accessed = 4 * (xpad.size + wtap.size + n * h * w * 4 * c_out)

    out4 = pl.pallas_call(
        functools.partial(_upconv_kernel, th=th, w_in=w, c_out=c_out,
                          compute_dtype=compute_dtype),
        out_shape=jax.ShapeDtypeStruct((n * h, 2, w, 2 * c_out), x.dtype),
        grid_spec=pltpu.PrefetchScalarGridSpec(
            num_scalar_prefetch=0,
            grid=grid,
            in_specs=[
                # Whole padded image per batch item: index map is constant in r,
                # so the block stays VMEM-resident while the row-tile axis sweeps.
                pl.BlockSpec((1, h + 2, w + 2, c_in), lambda b_, r: (b_, 0, 0, 0)),
                pl.BlockSpec((3, 3, c_in, 4 * c_out), lambda b_, r: (0, 0, 0, 0)),
                pl.BlockSpec((1, 4 * c_out), lambda b_, r: (0, 0)),
            ],
            out_specs=pl.BlockSpec(
                (th, 2, w, 2 * c_out),
                lambda b_, r: (b_ * n_row_tiles + r, 0, 0, 0)),
        ),
        compiler_params=pltpu.CompilerParams(
            dimension_semantics=("parallel", "parallel")),
        cost_estimate=pl.CostEstimate(flops=flops, transcendentals=0,
                                      bytes_accessed=bytes_accessed),
    )(xpad, wtap, b_comb)

    # (N*H, 2, W, 2*C_out) is row-major identical to NHWC (N, 2H, 2W, C_out):
    # the reshape is free; one transpose returns the module's NCHW layout.
    out_nhwc = out4.reshape(n, 2 * h, 2 * w, c_out)
    return jnp.transpose(out_nhwc, (0, 3, 1, 2))


def _reference(x, params, eps=1e-5):
    """Pure-JAX reference with identical eval-mode semantics."""
    xu = jnp.repeat(jnp.repeat(x, 2, axis=2), 2, axis=3)          # nearest x2
    y = lax.conv_general_dilated(xu, params["w"], (1, 1), ((1, 1), (1, 1)),
                                 dimension_numbers=("NCHW", "OIHW", "NCHW"))
    y = y + params["b"][None, :, None, None]
    s = params["bn_gamma"] / jnp.sqrt(params["bn_var"] + eps)
    y = (y - params["bn_mean"][None, :, None, None]) * s[None, :, None, None] \
        + params["bn_beta"][None, :, None, None]
    return jnp.maximum(y, 0.0)


def init_params(key, c_in, c_out):
    ks = jax.random.split(key, 4)
    return {
        "w": jax.random.normal(ks[0], (c_out, c_in, 3, 3), jnp.float32) * 0.1,
        "b": jax.random.normal(ks[1], (c_out,), jnp.float32) * 0.1,
        # TODO(synk): BatchNorm is folded with eval-mode running stats; training-mode
        # batch statistics are not modeled.
        "bn_gamma": jnp.ones((c_out,), jnp.float32) * 1.05,
        "bn_beta": jnp.ones((c_out,), jnp.float32) * 0.02,
        "bn_mean": jax.random.normal(ks[2], (c_out,), jnp.float32) * 0.05,
        "bn_var": jnp.ones((c_out,), jnp.float32) * 0.9
                  + jnp.abs(jax.random.normal(ks[3], (c_out,), jnp.float32)) * 0.1,
    }


if __name__ == "__main__":
    N, C_IN, C_OUT, H, W = 2, 4, 8, 16, 16

    key = jax.random.PRNGKey(0)
    kx, kp = jax.random.split(key)
    x = jax.random.normal(kx, (N, C_IN, H, W), jnp.float32)
    params = init_params(kp, C_IN, C_OUT)

    out = up_conv_forward(x, params, row_tile=8)
    out = jax.block_until_ready(out)

    ref = _reference(x, params)
    assert out.shape == (N, C_OUT, 2 * H, 2 * W), out.shape
    assert jnp.allclose(out, ref, atol=2e-5, rtol=2e-5), \
        float(jnp.max(jnp.abs(out - ref)))

    print("KERNEL_OK")
</pallas_src>

<mosaic_0001>
module attributes {stable_mosaic.version = 11 : i64} {
  func.func @_upconv_kernel(%arg0: i32, %arg1: i32, %arg2: memref<1x18x18x4xf32, #tpu.memory_space<vmem>>, %arg3: memref<3x3x4x32xf32, #tpu.memory_space<vmem>>, %arg4: memref<1x32xf32, #tpu.memory_space<vmem>>, %arg5: memref<8x2x16x16xf32, #tpu.memory_space<vmem>>) attributes {dimension_semantics = [#tpu.dimension_semantics<parallel>, #tpu.dimension_semantics<parallel>], iteration_bounds = array<i64: 2, 2>, scalar_prefetch = 0 : i64, scratch_operands = 0 : i64, tpu.core_type = #tpu.core_type<tc>, window_params = [{transform_indices = @transform_0, window_bounds = array<i64: 1, 18, 18, 4>}, {pipeline_mode = #tpu.pipeline_mode<synchronous>, transform_indices = @transform_1, window_bounds = array<i64: 3, 3, 4, 32>}, {pipeline_mode = #tpu.pipeline_mode<synchronous>, transform_indices = @transform_2, window_bounds = array<i64: 1, 32>}, {transform_indices = @transform_3, window_bounds = array<i64: 8, 2, 16, 16>}]} {
    %c8_i32 = arith.constant 8 : i32
    %0 = arith.muli %arg1, %c8_i32 : i32
    %cst = arith.constant 0.000000e+00 : f32
    %1 = vector.broadcast %cst : f32 to vector<128x32xf32>
    %c0_i32 = arith.constant 0 : i32
    %2 = arith.addi %0, %c0_i32 : i32
    %c0 = arith.constant 0 : index
    %3 = arith.index_cast %2 : i32 to index
    %c0_0 = arith.constant 0 : index
    %c0_1 = arith.constant 0 : index
    %4 = vector.load %arg2[%c0, %3, %c0_0, %c0_1] : memref<1x18x18x4xf32, #tpu.memory_space<vmem>>, vector<1x8x16x4xf32>
    %5 = vector.shape_cast %4 : vector<1x8x16x4xf32> to vector<8x16x4xf32>
    %6 = vector.shape_cast %5 : vector<8x16x4xf32> to vector<128x4xf32>
    %c0_2 = arith.constant 0 : index
    %c0_3 = arith.constant 0 : index
    %c0_4 = arith.constant 0 : index
    %c0_5 = arith.constant 0 : index
    %7 = vector.load %arg3[%c0_2, %c0_3, %c0_4, %c0_5] : memref<3x3x4x32xf32, #tpu.memory_space<vmem>>, vector<1x1x4x32xf32>
    %8 = vector.shape_cast %7 : vector<1x1x4x32xf32> to vector<4x32xf32>
    %cst_6 = arith.constant dense<0.000000e+00> : vector<128x32xf32>
    %9 = tpu.matmul %6, %8, %cst_6 {dimension_numbers = #tpu.dot_dimension_numbers<[1], [0], [0], [1], [0, 0, 1, 1], [], []>} : vector<128x4xf32>, vector<4x32xf32>, vector<128x32xf32> -> vector<128x32xf32>
    %10 = arith.addf %1, %9 : vector<128x32xf32>
    %c0_i32_7 = arith.constant 0 : i32
    %11 = arith.addi %0, %c0_i32_7 : i32
    %c0_8 = arith.constant 0 : index
    %12 = arith.index_cast %11 : i32 to index
    %c1 = arith.constant 1 : index
    %c0_9 = arith.constant 0 : index
    %13 = vector.load %arg2[%c0_8, %12, %c1, %c0_9] : memref<1x18x18x4xf32, #tpu.memory_space<vmem>>, vector<1x8x16x4xf32>
    %14 = vector.shape_cast %13 : vector<1x8x16x4xf32> to vector<8x16x4xf32>
    %15 = vector.shape_cast %14 : vector<8x16x4xf32> to vector<128x4xf32>
    %c0_10 = arith.constant 0 : index
    %c1_11 = arith.constant 1 : index
    %c0_12 = arith.constant 0 : index
    %c0_13 = arith.constant 0 : index
    %16 = vector.load %arg3[%c0_10, %c1_11, %c0_12, %c0_13] : memref<3x3x4x32xf32, #tpu.memory_space<vmem>>, vector<1x1x4x32xf32>
    %17 = vector.shape_cast %16 : vector<1x1x4x32xf32> to vector<4x32xf32>
    %cst_14 = arith.constant dense<0.000000e+00> : vector<128x32xf32>
    %18 = tpu.matmul %15, %17, %cst_14 {dimension_numbers = #tpu.dot_dimension_numbers<[1], [0], [0], [1], [0, 0, 1, 1], [], []>} : vector<128x4xf32>, vector<4x32xf32>, vector<128x32xf32> -> vector<128x32xf32>
    %19 = arith.addf %10, %18 : vector<128x32xf32>
    %c0_i32_15 = arith.constant 0 : i32
    %20 = arith.addi %0, %c0_i32_15 : i32
    %c0_16 = arith.constant 0 : index
    %21 = arith.index_cast %20 : i32 to index
    %c2 = arith.constant 2 : index
    %c0_17 = arith.constant 0 : index
    %22 = vector.load %arg2[%c0_16, %21, %c2, %c0_17] : memref<1x18x18x4xf32, #tpu.memory_space<vmem>>, vector<1x8x16x4xf32>
    %23 = vector.shape_cast %22 : vector<1x8x16x4xf32> to vector<8x16x4xf32>
    %24 = vector.shape_cast %23 : vector<8x16x4xf32> to vector<128x4xf32>
    %c0_18 = arith.constant 0 : index
    %c2_19 = arith.constant 2 : index
    %c0_20 = arith.constant 0 : index
    %c0_21 = arith.constant 0 : index
    %25 = vector.load %arg3[%c0_18, %c2_19, %c0_20, %c0_21] : memref<3x3x4x32xf32, #tpu.memory_space<vmem>>, vector<1x1x4x32xf32>
    %26 = vector.shape_cast %25 : vector<1x1x4x32xf32> to vector<4x32xf32>
    %cst_22 = arith.constant dense<0.000000e+00> : vector<128x32xf32>
    %27 = tpu.matmul %24, %26, %cst_22 {dimension_numbers = #tpu.dot_dimension_numbers<[1], [0], [0], [1], [0, 0, 1, 1], [], []>} : vector<128x4xf32>, vector<4x32xf32>, vector<128x32xf32> -> vector<128x32xf32>
    %28 = arith.addf %19, %27 : vector<128x32xf32>
    %c1_i32 = arith.constant 1 : i32
    %29 = arith.addi %0, %c1_i32 : i32
    %c0_23 = arith.constant 0 : index
    %30 = arith.index_cast %29 : i32 to index
    %c0_24 = arith.constant 0 : index
    %c0_25 = arith.constant 0 : index
    %31 = vector.load %arg2[%c0_23, %30, %c0_24, %c0_25] : memref<1x18x18x4xf32, #tpu.memory_space<vmem>>, vector<1x8x16x4xf32>
    %32 = vector.shape_cast %31 : vector<1x8x16x4xf32> to vector<8x16x4xf32>
    %33 = vector.shape_cast %32 : vector<8x16x4xf32> to vector<128x4xf32>
    %c1_26 = arith.constant 1 : index
    %c0_27 = arith.constant 0 : index
    %c0_28 = arith.constant 0 : index
    %c0_29 = arith.constant 0 : index
    %34 = vector.load %arg3[%c1_26, %c0_27, %c0_28, %c0_29] : memref<3x3x4x32xf32, #tpu.memory_space<vmem>>, vector<1x1x4x32xf32>
    %35 = vector.shape_cast %34 : vector<1x1x4x32xf32> to vector<4x32xf32>
    %cst_30 = arith.constant dense<0.000000e+00> : vector<128x32xf32>
    %36 = tpu.matmul %33, %35, %cst_30 {dimension_numbers = #tpu.dot_dimension_numbers<[1], [0], [0], [1], [0, 0, 1, 1], [], []>} : vector<128x4xf32>, vector<4x32xf32>, vector<128x32xf32> -> vector<128x32xf32>
    %37 = arith.addf %28, %36 : vector<128x32xf32>
    %c1_i32_31 = arith.constant 1 : i32
    %38 = arith.addi %0, %c1_i32_31 : i32
    %c0_32 = arith.constant 0 : index
    %39 = arith.index_cast %38 : i32 to index
    %c1_33 = arith.constant 1 : index
    %c0_34 = arith.constant 0 : index
    %40 = vector.load %arg2[%c0_32, %39, %c1_33, %c0_34] : memref<1x18x18x4xf32, #tpu.memory_space<vmem>>, vector<1x8x16x4xf32>
    %41 = vector.shape_cast %40 : vector<1x8x16x4xf32> to vector<8x16x4xf32>
    %42 = vector.shape_cast %41 : vector<8x16x4xf32> to vector<128x4xf32>
    %c1_35 = arith.constant 1 : index
    %c1_36 = arith.constant 1 : index
    %c0_37 = arith.constant 0 : index
    %c0_38 = arith.constant 0 : index
    %43 = vector.load %arg3[%c1_35, %c1_36, %c0_37, %c0_38] : memref<3x3x4x32xf32, #tpu.memory_space<vmem>>, vector<1x1x4x32xf32>
    %44 = vector.shape_cast %43 : vector<1x1x4x32xf32> to vector<4x32xf32>
    %cst_39 = arith.constant dense<0.000000e+00> : vector<128x32xf32>
    %45 = tpu.matmul %42, %44, %cst_39 {dimension_numbers = #tpu.dot_dimension_numbers<[1], [0], [0], [1], [0, 0, 1, 1], [], []>} : vector<128x4xf32>, vector<4x32xf32>, vector<128x32xf32> -> vector<128x32xf32>
    %46 = arith.addf %37, %45 : vector<128x32xf32>
    %c1_i32_40 = arith.constant 1 : i32
    %47 = arith.addi %0, %c1_i32_40 : i32
    %c0_41 = arith.constant 0 : index
    %48 = arith.index_cast %47 : i32 to index
    %c2_42 = arith.constant 2 : index
    %c0_43 = arith.constant 0 : index
    %49 = vector.load %arg2[%c0_41, %48, %c2_42, %c0_43] : memref<1x18x18x4xf32, #tpu.memory_space<vmem>>, vector<1x8x16x4xf32>
    %50 = vector.shape_cast %49 : vector<1x8x16x4xf32> to vector<8x16x4xf32>
    %51 = vector.shape_cast %50 : vector<8x16x4xf32> to vector<128x4xf32>
    %c1_44 = arith.constant 1 : index
    %c2_45 = arith.constant 2 : index
    %c0_46 = arith.constant 0 : index
    %c0_47 = arith.constant 0 : index
    %52 = vector.load %arg3[%c1_44, %c2_45, %c0_46, %c0_47] : memref<3x3x4x32xf32, #tpu.memory_space<vmem>>, vector<1x1x4x32xf32>
    %53 = vector.shape_cast %52 : vector<1x1x4x32xf32> to vector<4x32xf32>
    %cst_48 = arith.constant dense<0.000000e+00> : vector<128x32xf32>
    %54 = tpu.matmul %51, %53, %cst_48 {dimension_numbers = #tpu.dot_dimension_numbers<[1], [0], [0], [1], [0, 0, 1, 1], [], []>} : vector<128x4xf32>, vector<4x32xf32>, vector<128x32xf32> -> vector<128x32xf32>
    %55 = arith.addf %46, %54 : vector<128x32xf32>
    %c2_i32 = arith.constant 2 : i32
    %56 = arith.addi %0, %c2_i32 : i32
    %c0_49 = arith.constant 0 : index
    %57 = arith.index_cast %56 : i32 to index
    %c0_50 = arith.constant 0 : index
    %c0_51 = arith.constant 0 : index
    %58 = vector.load %arg2[%c0_49, %57, %c0_50, %c0_51] : memref<1x18x18x4xf32, #tpu.memory_space<vmem>>, vector<1x8x16x4xf32>
    %59 = vector.shape_cast %58 : vector<1x8x16x4xf32> to vector<8x16x4xf32>
    %60 = vector.shape_cast %59 : vector<8x16x4xf32> to vector<128x4xf32>
    %c2_52 = arith.constant 2 : index
    %c0_53 = arith.constant 0 : index
    %c0_54 = arith.constant 0 : index
    %c0_55 = arith.constant 0 : index
    %61 = vector.load %arg3[%c2_52, %c0_53, %c0_54, %c0_55] : memref<3x3x4x32xf32, #tpu.memory_space<vmem>>, vector<1x1x4x32xf32>
    %62 = vector.shape_cast %61 : vector<1x1x4x32xf32> to vector<4x32xf32>
    %cst_56 = arith.constant dense<0.000000e+00> : vector<128x32xf32>
    %63 = tpu.matmul %60, %62, %cst_56 {dimension_numbers = #tpu.dot_dimension_numbers<[1], [0], [0], [1], [0, 0, 1, 1], [], []>} : vector<128x4xf32>, vector<4x32xf32>, vector<128x32xf32> -> vector<128x32xf32>
    %64 = arith.addf %55, %63 : vector<128x32xf32>
    %c2_i32_57 = arith.constant 2 : i32
    %65 = arith.addi %0, %c2_i32_57 : i32
    %c0_58 = arith.constant 0 : index
    %66 = arith.index_cast %65 : i32 to index
    %c1_59 = arith.constant 1 : index
    %c0_60 = arith.constant 0 : index
    %67 = vector.load %arg2[%c0_58, %66, %c1_59, %c0_60] : memref<1x18x18x4xf32, #tpu.memory_space<vmem>>, vector<1x8x16x4xf32>
    %68 = vector.shape_cast %67 : vector<1x8x16x4xf32> to vector<8x16x4xf32>
    %69 = vector.shape_cast %68 : vector<8x16x4xf32> to vector<128x4xf32>
    %c2_61 = arith.constant 2 : index
    %c1_62 = arith.constant 1 : index
    %c0_63 = arith.constant 0 : index
    %c0_64 = arith.constant 0 : index
    %70 = vector.load %arg3[%c2_61, %c1_62, %c0_63, %c0_64] : memref<3x3x4x32xf32, #tpu.memory_space<vmem>>, vector<1x1x4x32xf32>
    %71 = vector.shape_cast %70 : vector<1x1x4x32xf32> to vector<4x32xf32>
    %cst_65 = arith.constant dense<0.000000e+00> : vector<128x32xf32>
    %72 = tpu.matmul %69, %71, %cst_65 {dimension_numbers = #tpu.dot_dimension_numbers<[1], [0], [0], [1], [0, 0, 1, 1], [], []>} : vector<128x4xf32>, vector<4x32xf32>, vector<128x32xf32> -> vector<128x32xf32>
    %73 = arith.addf %64, %72 : vector<128x32xf32>
    %c2_i32_66 = arith.constant 2 : i32
    %74 = arith.addi %0, %c2_i32_66 : i32
    %c0_67 = arith.constant 0 : index
    %75 = arith.index_cast %74 : i32 to index
    %c2_68 = arith.constant 2 : index
    %c0_69 = arith.constant 0 : index
    %76 = vector.load %arg2[%c0_67, %75, %c2_68, %c0_69] : memref<1x18x18x4xf32, #tpu.memory_space<vmem>>, vector<1x8x16x4xf32>
    %77 = vector.shape_cast %76 : vector<1x8x16x4xf32> to vector<8x16x4xf32>
    %78 = vector.shape_cast %77 : vector<8x16x4xf32> to vector<128x4xf32>
    %c2_70 = arith.constant 2 : index
    %c2_71 = arith.constant 2 : index
    %c0_72 = arith.constant 0 : index
    %c0_73 = arith.constant 0 : index
    %79 = vector.load %arg3[%c2_70, %c2_71, %c0_72, %c0_73] : memref<3x3x4x32xf32, #tpu.memory_space<vmem>>, vector<1x1x4x32xf32>
    %80 = vector.shape_cast %79 : vector<1x1x4x32xf32> to vector<4x32xf32>
    %cst_74 = arith.constant dense<0.000000e+00> : vector<128x32xf32>
    %81 = tpu.matmul %78, %80, %cst_74 {dimension_numbers = #tpu.dot_dimension_numbers<[1], [0], [0], [1], [0, 0, 1, 1], [], []>} : vector<128x4xf32>, vector<4x32xf32>, vector<128x32xf32> -> vector<128x32xf32>
    %82 = arith.addf %73, %81 : vector<128x32xf32>
    %c0_75 = arith.constant 0 : index
    %c0_76 = arith.constant 0 : index
    %83 = vector.load %arg4[%c0_75, %c0_76] : memref<1x32xf32, #tpu.memory_space<vmem>>, vector<1x32xf32>
    %84 = vector.broadcast %83 : vector<1x32xf32> to vector<128x32xf32>
    %85 = arith.addf %82, %84 : vector<128x32xf32>
    %cst_77 = arith.constant 0.000000e+00 : f32
    %86 = vector.broadcast %cst_77 : f32 to vector<128x32xf32>
    %87 = arith.maximumf %85, %86 : vector<128x32xf32>
    %88 = vector.extract_strided_slice %87 {offsets = [0, 0], sizes = [128, 16], strides = [1, 1]} : vector<128x32xf32> to vector<128x16xf32>
    %89 = vector.shape_cast %88 : vector<128x16xf32> to vector<8x16x16xf32>
    %c0_78 = arith.constant 0 : index
    %c0_79 = arith.constant 0 : index
    %c0_80 = arith.constant 0 : index
    %c0_81 = arith.constant 0 : index
    %90 = vector.load %arg5[%c0_78, %c0_79, %c0_80, %c0_81] : memref<8x2x16x16xf32, #tpu.memory_space<vmem>>, vector<8x1x16x16xf32>
    %91 = vector.shape_cast %90 : vector<8x1x16x16xf32> to vector<8x16x16xf32>
    %92 = vector.shape_cast %89 : vector<8x16x16xf32> to vector<8x1x16x16xf32>
    tpu.vector_store %arg5[%c0_78, %c0_79, %c0_80, %c0_81], %92 {strides = array<i32>} : memref<8x2x16x16xf32, #tpu.memory_space<vmem>>, vector<8x1x16x16xf32>,
    %93 = vector.extract_strided_slice %87 {offsets = [0, 16], sizes = [128, 16], strides = [1, 1]} : vector<128x32xf32> to vector<128x16xf32>
    %94 = vector.shape_cast %93 : vector<128x16xf32> to vector<8x16x16xf32>
    %c0_82 = arith.constant 0 : index
    %c1_83 = arith.constant 1 : index
    %c0_84 = arith.constant 0 : index
    %c0_85 = arith.constant 0 : index
    %95 = vector.load %arg5[%c0_82, %c1_83, %c0_84, %c0_85] : memref<8x2x16x16xf32, #tpu.memory_space<vmem>>, vector<8x1x16x16xf32>
    %96 = vector.shape_cast %95 : vector<8x1x16x16xf32> to vector<8x16x16xf32>
    %97 = vector.shape_cast %94 : vector<8x16x16xf32> to vector<8x1x16x16xf32>
    tpu.vector_store %arg5[%c0_82, %c1_83, %c0_84, %c0_85], %97 {strides = array<i32>} : memref<8x2x16x16xf32, #tpu.memory_space<vmem>>, vector<8x1x16x16xf32>,
    return
  }
  func.func @transform_0(%arg0: i32, %arg1: i32) -> (i32, i32, i32, i32) {
    %c0_i32 = arith.constant 0 : i32
    %c0_i32_0 = arith.constant 0 : i32
    %c0_i32_1 = arith.constant 0 : i32
    %c0_i32_2 = arith.constant 0 : i32
    return %arg0, %c0_i32, %c0_i32_0, %c0_i32_1 : i32, i32, i32, i32
  }
  func.func @transform_1(%arg0: i32, %arg1: i32) -> (i32, i32, i32, i32) {
    %c0_i32 = arith.constant 0 : i32
    %c0_i32_0 = arith.constant 0 : i32
    %c0_i32_1 = arith.constant 0 : i32
    %c0_i32_2 = arith.constant 0 : i32
    %c0_i32_3 = arith.constant 0 : i32
    return %c0_i32, %c0_i32_0, %c0_i32_1, %c0_i32_2 : i32, i32, i32, i32
  }
  func.func @transform_2(%arg0: i32, %arg1: i32) -> (i32, i32) {
    %c0_i32 = arith.constant 0 : i32
    %c0_i32_0 = arith.constant 0 : i32
    %c0_i32_1 = arith.constant 0 : i32
    return %c0_i32, %c0_i32_0 : i32, i32
  }
  func.func @transform_3(%arg0: i32, %arg1: i32) -> (i32, i32, i32, i32) {
    %c2_i32 = arith.constant 2 : i32
    %0 = arith.muli %arg0, %c2_i32 : i32
    %1 = arith.addi %0, %arg1 : i32
    %c0_i32 = arith.constant 0 : i32
    %c0_i32_0 = arith.constant 0 : i32
    %c0_i32_1 = arith.constant 0 : i32
    %c0_i32_2 = arith.constant 0 : i32
    return %1, %c0_i32, %c0_i32_0, %c0_i32_1 : i32, i32, i32, i32
  }
}

</mosaic_0001>

<llo_original>
// kernel: tile.8
$region0: #{tile.8}
  #allocation0 [shape = 's32[1]{0}', space=sflag, size = 0x4, scoped, tag = 'scoped memory for tile.8']
  %s0 = inlined_call_operand.vmem [shape: f32[8], index: 0, kind: input, shape index: {}]
  %s1 = inlined_call_operand.vmem [shape: f32[4,8], index: 1, kind: output, shape index: {}]
  // Predicated region
  $region2: #{tile.8} parent=0 // pred_check
    _
  $region3: #{tile.8} parent=0 // pred_check_branch
    %3 = sbr.rel (0) target = $region5
  $region4: #{tile.8} parent=0 // pred_region
    _
  $region5: #{tile.8} parent=0 // pred_fallthru
    _
  %v4 = vld [vmem:[%s0] ss:$0 sm:$0xff]
  %5 = vst [vmem:[%s1] sm:$0xf] %v4

// kernel: tile.9
$region0: #{tile.9}
  %s0 = inlined_call_operand.vmem [shape: f32[4,8], index: 0, kind: input, shape index: {}]
  %s1 = inlined_call_operand.vmem [shape: f32[1,32], index: 1, kind: output, shape index: {}]
  $region1: #{tile.9} parent=0
    #allocation0 [shape = 'u8[4096]{0}', space=vmem, size = 0x1000, scoped, tag = 'scoped mem for output reshape']
    #allocation1 [shape = 'u8[4096]{0}', space=vmem, size = 0x1000, scoped, tag = 'scoped mem for input reshape']
    %s3 = ssub.s32 16, 1
    %v4 = vld [vmem:[%s0] sm:%s3]
    %5 = vst [vmem:[#allocation1] sm:%s3] %v4
    %v6 = vld [vmem:[#allocation1] sm:$0x1]
    %vm7 = vcmask 64512
    %8 = vst.msk [vmem:[#allocation0] sm:$0x1] %vm7, %v6
    %s9 = scalar_lea.vmem [#allocation1], 3
    %v10 = vld [vmem:[%s9] sm:$0x1]
    %11 = vrot.lane.b32.xlu0 %v10, 24
    %v12 = vpop.permute.xlu0 %11
    %vm13 = vcmask 261312
    %14 = vst.msk [vmem:[#allocation0] sm:$0x1] %vm13, %v12
    %s15 = scalar_lea.vmem [#allocation1], 2
    %v16 = vld [vmem:[%s15] sm:$0x1]
    %17 = vrot.lane.b32.xlu0 %v16, 16
    %v18 = vpop.permute.xlu0 %17
    %vm19 = vcmask 195712
    %20 = vst.msk [vmem:[#allocation0] sm:$0x1] %vm19, %v18
    %s21 = scalar_lea.vmem [#allocation1], 1
    %v22 = vld [vmem:[%s21] sm:$0x1]
    %23 = vrot.lane.b32.xlu0 %v22, 8
    %v24 = vpop.permute.xlu0 %23
    %vm25 = vcmask 130112
    %26 = vst.msk [vmem:[#allocation0] sm:$0x1] %vm25, %v24
    %s28 = ssub.s32 2, 1
    %v29 = vld [vmem:[#allocation0] sm:%s28]
    %s31 = ssub.s32 2, 1
    %32 = vst [vmem:[%s1] sm:%s31] %v29

// kernel: up_conv_forward.1
$region0: #{up_conv_forward.1}
  #allocation0 [shape = 'u32[]', space=smem, size = 0x4, offset = 0x4, fixed_abs, tag = 'smem constant byte address 0x4 - core index']
  #allocation1 [shape = 'u32[72,128]{1,0:T(1,128)}', space=vmem, size = 0x9000, scoped, tag = 'internal scratch']
  %s0 = inlined_call_operand.vmem [shape: f32[2,18,18,4], index: 0, kind: input, shape index: {}]
  %s1 = inlined_call_operand.vmem [shape: f32[3,3,4,32], index: 1, kind: input, shape index: {}]
  %s2 = inlined_call_operand.vmem [shape: f32[1,32], index: 2, kind: input, shape index: {}]
  %s3 = inlined_call_operand.vmem [shape: f32[32,2,16,16], index: 3, kind: output, shape index: {}]
  %s4 = sld [smem:[#allocation0]]
  $region45: #{up_conv_forward.1} parent=0
    _
  %s6 = ssub.s32 1, %s4
  %s7 = scalar_select 0, %s6, %s4
  loop: start=0, step=1, limit=6
  $region2: #{up_conv_forward.1} parent=0 // loop_pre_header
    _
  $region3: #{up_conv_forward.1} parent=0 // loop_header
    %s9 = sphi 0, %s13
    %p10 = scmp.ge.s32.totalorder %s9, 6
    %s16 = sphi 0, %s28
    %s17 = sphi 0, %s24
    %s18 = sphi 0, %s16
    %s19 = sphi 0, %s17
    %s20 = sphi 0, %s18
    %s21 = sphi 0, %s19
    %s31 = sphi 0, %s33
    %s34 = sphi 0, %s31
    %s35 = sphi 0, %s34
    %s51 = sphi 0, %s35
    %s55 = sphi 0, %s55
    %s57 = sphi 0, %s55
    %s58 = sphi 0, %s57
    %s72 = sphi 0, %s58
    %s76 = sphi 0, %s76
    %s78 = sphi 0, %s76
    %s79 = sphi 0, %s78
    %s93 = sphi 0, %s79
    %s103 = sphi 0, %s105
    %s106 = sphi 0, %s103
    %s107 = sphi 0, %s106
    %s123 = sphi 0, %s107
  $region4: #{up_conv_forward.1} parent=0 // loop_header_branch
    %12 = sbr.rel (%p10) target = $region8
  $region5: #{up_conv_forward.1} parent=0 // loop_body
    %s14 = ssub.s32 %s9, 1
    %s15 = ssub.s32 %s9, 2
    %s22 = sadd.s32 1, %s17
    %p23 = scmp.ge.s32.totalorder %s22, 2
    %s24 = scalar_select %p23, 0, %s22
    %s25 = sadd.s32 1, %s16
    %s26 = scalar_select %p23, %s25, %s16
    %p27 = scmp.ge.s32.totalorder %s26, 2
    %s28 = scalar_select %p27, 0, %s26
    %s29 = ssub.s32 %s16, %s28
    %p30 = scmp.eq.s32.totalorder %s29, 0
    %s32 = sadd.s32 %s31, 1
    %s33 = scalar_select %p30, %s31, %s32
    %p36 = pneg %p30
    %p37 = scmp.eq.s32.totalorder %s9, 3
    %p38 = por %p36, %p37
    %p39 = scmp.ne.s32.totalorder %s31, %s34
    %p40 = scmp.eq.s32.totalorder %s9, 0
    %p41 = por %p39, %p40
    %p42 = scmp.ne.s32.totalorder %s31, %s34
    %p43 = scmp.eq.s32.totalorder %s14, 3
    %p44 = por %p42, %p43
    %p45 = scmp.ne.s32.totalorder %s34, %s35
    %p46 = scmp.eq.s32.totalorder %s14, 0
    %p47 = por %p45, %p46
    %p48 = scmp.ne.s32.totalorder %s34, %s35
    %p49 = scmp.eq.s32.totalorder %s15, 3
    %p50 = por %p48, %p49
    %p52 = scmp.ne.s32.totalorder %s35, %s51
    %p53 = scmp.eq.s32.totalorder %s15, 0
    %p54 = por %p52, %p53
    %s56 = sadd.s32 %s55, 1
    %p59 = scmp.eq.s32.totalorder %s9, 3
    %p60 = scmp.ne.s32.totalorder %s55, %s57
    %p61 = scmp.eq.s32.totalorder %s9, 0
    %p62 = por %p60, %p61
    %p63 = scmp.ne.s32.totalorder %s55, %s57
    %p64 = scmp.eq.s32.totalorder %s14, 3
    %p65 = por %p63, %p64
    %p66 = scmp.ne.s32.totalorder %s57, %s58
    %p67 = scmp.eq.s32.totalorder %s14, 0
    %p68 = por %p66, %p67
    %p69 = scmp.ne.s32.totalorder %s57, %s58
    %p70 = scmp.eq.s32.totalorder %s15, 3
    %p71 = por %p69, %p70
    %p73 = scmp.ne.s32.totalorder %s58, %s72
    %p74 = scmp.eq.s32.totalorder %s15, 0
    %p75 = por %p73, %p74
    %s77 = sadd.s32 %s76, 1
    %p80 = scmp.eq.s32.totalorder %s9, 3
    %p81 = scmp.ne.s32.totalorder %s76, %s78
    %p82 = scmp.eq.s32.totalorder %s9, 0
    %p83 = por %p81, %p82
    %p84 = scmp.ne.s32.totalorder %s76, %s78
    %p85 = scmp.eq.s32.totalorder %s14, 3
    %p86 = por %p84, %p85
    %p87 = scmp.ne.s32.totalorder %s78, %s79
    %p88 = scmp.eq.s32.totalorder %s14, 0
    %p89 = por %p87, %p88
    %p90 = scmp.ne.s32.totalorder %s78, %s79
    %p91 = scmp.eq.s32.totalorder %s15, 3
    %p92 = por %p90, %p91
    %p94 = scmp.ne.s32.totalorder %s79, %s93
    %p95 = scmp.eq.s32.totalorder %s15, 0
    %p96 = por %p94, %p95
    %s97 = smul.u32 %s16, 2
    %s98 = sadd.s32 %s97, %s17
    %s99 = smul.u32 %s28, 2
    %s100 = sadd.s32 %s99, %s24
    %s101 = ssub.s32 %s98, %s100
    %p102 = scmp.eq.s32.totalorder %s101, 0
    %s104 = sadd.s32 %s103, 1
    %s105 = scalar_select %p102, %s103, %s104
    %p108 = pneg %p102
    %p109 = scmp.eq.s32.totalorder %s9, 3
    %p110 = por %p108, %p109
    %p111 = scmp.ne.s32.totalorder %s103, %s106
    %p112 = scmp.eq.s32.totalorder %s9, 0
    %p113 = por %p111, %p112
    %p114 = scmp.ne.s32.totalorder %s103, %s106
    %p115 = scmp.eq.s32.totalorder %s14, 3
    %p116 = por %p114, %p115
    %p117 = scmp.ne.s32.totalorder %s106, %s107
    %p118 = scmp.eq.s32.totalorder %s14, 0
    %p119 = por %p117, %p118
    %p120 = scmp.ne.s32.totalorder %s106, %s107
    %p121 = scmp.eq.s32.totalorder %s15, 3
    %p122 = por %p120, %p121
    %p124 = scmp.ne.s32.totalorder %s107, %s123
    %p125 = scmp.eq.s32.totalorder %s15, 0
    %p126 = por %p124, %p125
    %p127 = scmp.le.s32.totalorder 1, %s9
    %p128 = scmp.lt.s32.totalorder %s9, 5
    %p129 = pnand %p127, %p128
    %p130 = pneg %p129
    // Predicated region
    $region9: #{up_conv_forward.1} parent=5 // pred_check
      _
    $region10: #{up_conv_forward.1} parent=5 // pred_check_branch
      %132 = sbr.rel (%p129) target = $region12
    $region11: #{up_conv_forward.1} parent=5 // pred_region
      %s133 = ssub.s32 %s9, 1
      // Predicated region
      $region13: #{up_conv_forward.1} parent=11 // pred_check
        %p134 = pneg %p68
      $region14: #{up_conv_forward.1} parent=11 // pred_check_branch
        %136 = sbr.rel (%p134) target = $region16
      $region15: #{up_conv_forward.1} parent=11 // pred_region
        _
      $region16: #{up_conv_forward.1} parent=11 // pred_fallthru
        _
      // Predicated region
      $region17: #{up_conv_forward.1} parent=11 // pred_check
        %p137 = pneg %p89
      $region18: #{up_conv_forward.1} parent=11 // pred_check_branch
        %139 = sbr.rel (%p137) target = $region20
      $region19: #{up_conv_forward.1} parent=11 // pred_region
        _
      $region20: #{up_conv_forward.1} parent=11 // pred_fallthru
        _
    $region12: #{up_conv_forward.1} parent=5 // pred_fallthru
      _
    %p140 = scmp.lt.s32.totalorder %s9, 4
    // Predicated region
    $region21: #{up_conv_forward.1} parent=5 // pred_check
      %p141 = pneg %p140
    $region22: #{up_conv_forward.1} parent=5 // pred_check_branch
      %143 = sbr.rel (%p141) target = $region24
    $region23: #{up_conv_forward.1} parent=5 // pred_region
      // Predicated region
      $region25: #{up_conv_forward.1} parent=23 // pred_check
        %p144 = pneg %p41
      $region26: #{up_conv_forward.1} parent=23 // pred_check_branch
        %146 = sbr.rel (%p144) target = $region28
      $region27: #{up_conv_forward.1} parent=23 // pred_region
        %p147 = scmp.lt.s32.totalorder %s16, 1
        %s148 = scalar_select %p147, %s16, 1
        %s149 = smul.addr %s148, 54
        %s150 = smul.addr %s149, 8
        %s151 = scalar_lea.vmem %s0, %s150
      $region28: #{up_conv_forward.1} parent=23 // pred_fallthru
        _
    $region24: #{up_conv_forward.1} parent=5 // pred_fallthru
      _
    %p152 = scmp.le.s32.totalorder 1, %s9
    %p153 = scmp.lt.s32.totalorder %s9, 5
    %p154 = pnand %p152, %p153
    %p155 = pneg %p154
    // Predicated region
    $region29: #{up_conv_forward.1} parent=5 // pred_check
      _
    $region30: #{up_conv_forward.1} parent=5 // pred_check_branch
      %157 = sbr.rel (%p154) target = $region32
    $region31: #{up_conv_forward.1} parent=5 // pred_region
      %s158 = ssub.s32 %s9, 1
      %p159 = scmp.lt.s32.totalorder %s18, 1
      %s160 = scalar_select %p159, %s18, 1
      %s161 = smul.addr %s160, 54
      %s162 = smul.addr %s161, 8
      %s163 = scalar_lea.vmem %s0, %s162
      %p164 = pneg %p47
      %p165 = pneg %p44
      %p166 = pneg %p68
      %p167 = pneg %p65
      %p168 = pneg %p89
      %p169 = pneg %p86
      %p170 = pneg %p119
      %p171 = pneg %p116
      %s172 = smul.u32 %s18, 2
      %s173 = sadd.s32 %s172, %s19
      %s174 = smul.u32 8, %s173
      %p175 = scmp.lt.s32.totalorder %s174, 31
      %s176 = scalar_select %p175, %s174, 31
      %s177 = smul.addr %s176, 4
      %s178 = smul.addr %s177, 8
      %s179 = scalar_lea.vmem %s3, %s178
      %p180 = scmp.lt.s32.totalorder %s18, 1
      %s181 = scalar_select %p180, %s18, 1
      %s182 = smul.addr %s181, 54
      %s183 = smul.addr %s182, 8
      %s184 = scalar_lea.vmem %s0, %s183
      %s185 = smul.u32 %s18, 2
      %s186 = sadd.s32 %s185, %s19
      %s187 = smul.u32 8, %s186
      %p188 = scmp.lt.s32.totalorder %s187, 31
      %s189 = scalar_select %p188, %s187, 31
      %s190 = smul.addr %s189, 4
      %s191 = smul.addr %s190, 8
      %s192 = scalar_lea.vmem %s3, %s191
      %s193 = smul.u32 %s18, 2
      %s194 = sadd.s32 %s193, %s19
      %s195 = smul.u32 8, %s194
      %s196 = smul.u32 %s19, 8
      %s197 = smul.u32 %s196, 24
      %s198 = scalar_lea.vmem %s184, %s197
      %v199 = vld [vmem:[%s198] sm:$0xff]
      %v200 = vld [vmem:[%s198 + $0x8] sm:$0xff]
      %v201 = vld [vmem:[%s198 + $0x18] sm:$0xff]
      %v202 = vld [vmem:[%s198 + $0x20] sm:$0xff]
      %v203 = vld [vmem:[%s198 + $0x30] sm:$0xff]
      %v204 = vld [vmem:[%s198 + $0x38] sm:$0xff]
      %v205 = vld [vmem:[%s198 + $0x48] sm:$0xff]
      %v206 = vld [vmem:[%s198 + $0x50] sm:$0xff]
      %v207 = vld [vmem:[%s198 + $0x60] sm:$0xff]
      %v208 = vld [vmem:[%s198 + $0x68] sm:$0xff]
      %v209 = vld [vmem:[%s198 + $0x78] sm:$0xff]
      %v210 = vld [vmem:[%s198 + $0x80] sm:$0xff]
      %v211 = vld [vmem:[%s198 + $0x90] sm:$0xff]
      %v212 = vld [vmem:[%s198 + $0x98] sm:$0xff]
      %v213 = vld [vmem:[%s198 + $0xa8] sm:$0xff]
      %v214 = vld [vmem:[%s198 + $0xb0] sm:$0xff]
      %v215 = vld [vmem:[%s1] sm:$0xf]
      %v216 = vld [vmem:[%s198 + $0x1] sm:$0xff]
      %v217 = vld [vmem:[%s198 + $0x9] sm:$0xff]
      %v218 = vld [vmem:[%s198 + $0x19] sm:$0xff]
      %v219 = vld [vmem:[%s198 + $0x21] sm:$0xff]
      %v220 = vld [vmem:[%s198 + $0x31] sm:$0xff]
      %v221 = vld [vmem:[%s198 + $0x39] sm:$0xff]
      %v222 = vld [vmem:[%s198 + $0x49] sm:$0xff]
      %v223 = vld [vmem:[%s198 + $0x51] sm:$0xff]
      %v224 = vld [vmem:[%s198 + $0x61] sm:$0xff]
      %v225 = vld [vmem:[%s198 + $0x69] sm:$0xff]
      %v226 = vld [vmem:[%s198 + $0x79] sm:$0xff]
      %v227 = vld [vmem:[%s198 + $0x81] sm:$0xff]
      %v228 = vld [vmem:[%s198 + $0x91] sm:$0xff]
      %v229 = vld [vmem:[%s198 + $0x99] sm:$0xff]
      %v230 = vld [vmem:[%s198 + $0xa9] sm:$0xff]
      %v231 = vld [vmem:[%s198 + $0xb1] sm:$0xff]
      %s232 = scalar_lea.vmem %s1, 4
      %v233 = vld [vmem:[%s232] sm:$0xf]
      %vm234 = vcmask 31744
      %v236 = vsel %vm234, %v216, 0
      %v239 = vsel %vm234, %v217, 0
      %v242 = vsel %vm234, %v218, 0
      %v245 = vsel %vm234, %v219, 0
      %v248 = vsel %vm234, %v220, 0
      %v251 = vsel %vm234, %v221, 0
      %v254 = vsel %vm234, %v222, 0
      %v257 = vsel %vm234, %v223, 0
      %v260 = vsel %vm234, %v224, 0
      %v263 = vsel %vm234, %v225, 0
      %v266 = vsel %vm234, %v226, 0
      %v269 = vsel %vm234, %v227, 0
      %v272 = vsel %vm234, %v228, 0
      %v275 = vsel %vm234, %v229, 0
      %v278 = vsel %vm234, %v230, 0
      %v281 = vsel %vm234, %v231, 0
      %vm283 = vcmask 1043456
      %v285 = vsel %vm283, %v233, 0
      %287 = vmatpush.msra.mxu0 0.0
      %288 = vmatpush.msra.mxu0 0.0
      %289 = vmatpush.msra.mxu0 0.0
      %290 = vmatpush.msra.mxu0 0.0
      %291 = vmatpush.msra.mxu0 0.0
      %292 = vmatpush.msra.mxu0 0.0
      %293 = vmatpush.msra.mxu0 0.0
      %294 = vmatpush.msra.mxu0 0.0
      %295 = vmatpush.msra.mxu0 0.0
      %296 = vmatpush.msra.mxu0 0.0
      %297 = vmatpush.msra.mxu0 0.0
      %298 = vmatpush.msra.mxu0 0.0
      %299 = vmatpush.msra.mxu0 0.0
      %300 = vmatpush.msra.mxu0 0.0
      %301 = vmatpush.msra.mxu0 0.0
      %302 = vmatpush.msra.mxu0 %v285
      %303 = vmatmul.f32.gmra.mxu0 %v236
      %v304 = vpop.f32.mrf.mxu0
      %v305 = vadd.f32 0.0, %v304
      %306 = vmatmul.f32.gmra.mxu0 %v239
      %v307 = vpop.f32.mrf.mxu0
      %v308 = vadd.f32 0.0, %v307
      %309 = vmatmul.f32.gmra.mxu0 %v242
      %v310 = vpop.f32.mrf.mxu0
      %v311 = vadd.f32 0.0, %v310
      %312 = vmatmul.f32.gmra.mxu0 %v245
      %v313 = vpop.f32.mrf.mxu0
      %v314 = vadd.f32 0.0, %v313
      %315 = vmatmul.f32.gmra.mxu0 %v248
      %v316 = vpop.f32.mrf.mxu0
      %v317 = vadd.f32 0.0, %v316
      %318 = vmatmul.f32.gmra.mxu0 %v251
      %v319 = vpop.f32.mrf.mxu0
      %v320 = vadd.f32 0.0, %v319
      %321 = vmatmul.f32.gmra.mxu0 %v254
      %v322 = vpop.f32.mrf.mxu0
      %v323 = vadd.f32 0.0, %v322
      %324 = vmatmul.f32.gmra.mxu0 %v257
      %v325 = vpop.f32.mrf.mxu0
      %v326 = vadd.f32 0.0, %v325
      %327 = vmatmul.f32.gmra.mxu0 %v260
      %v328 = vpop.f32.mrf.mxu0
      %v329 = vadd.f32 0.0, %v328
      %330 = vmatmul.f32.gmra.mxu0 %v263
      %v331 = vpop.f32.mrf.mxu0
      %v332 = vadd.f32 0.0, %v331
      %333 = vmatmul.f32.gmra.mxu0 %v266
      %v334 = vpop.f32.mrf.mxu0
      %v335 = vadd.f32 0.0, %v334
      %336 = vmatmul.f32.gmra.mxu0 %v269
      %v337 = vpop.f32.mrf.mxu0
      %v338 = vadd.f32 0.0, %v337
      %339 = vmatmul.f32.gmra.mxu0 %v272
      %v340 = vpop.f32.mrf.mxu0
      %v341 = vadd.f32 0.0, %v340
      %342 = vmatmul.f32.gmra.mxu0 %v275
      %v343 = vpop.f32.mrf.mxu0
      %v344 = vadd.f32 0.0, %v343
      %345 = vmatmul.f32.gmra.mxu0 %v278
      %v346 = vpop.f32.mrf.mxu0
      %v347 = vadd.f32 0.0, %v346
      %348 = vmatmul.f32.gmra.mxu0 %v281
      %v349 = vpop.f32.mrf.mxu0
      %v350 = vadd.f32 0.0, %v349
      %351 = vdwg.mxu0
      %v353 = vsel %vm234, %v199, 0
      %v356 = vsel %vm234, %v200, 0
      %v359 = vsel %vm234, %v201, 0
      %v362 = vsel %vm234, %v202, 0
      %v365 = vsel %vm234, %v203, 0
      %v368 = vsel %vm234, %v204, 0
      %v371 = vsel %vm234, %v205, 0
      %v374 = vsel %vm234, %v206, 0
      %v377 = vsel %vm234, %v207, 0
      %v380 = vsel %vm234, %v208, 0
      %v383 = vsel %vm234, %v209, 0
      %v386 = vsel %vm234, %v210, 0
      %v389 = vsel %vm234, %v211, 0
      %v392 = vsel %vm234, %v212, 0
      %v395 = vsel %vm234, %v213, 0
      %v398 = vsel %vm234, %v214, 0
      %v401 = vsel %vm283, %v215, 0
      %403 = vmatpush.msra.mxu0 0.0
      %404 = vmatpush.msra.mxu0 0.0
      %405 = vmatpush.msra.mxu0 0.0
      %406 = vmatpush.msra.mxu0 0.0
      %407 = vmatpush.msra.mxu0 0.0
      %408 = vmatpush.msra.mxu0 0.0
      %409 = vmatpush.msra.mxu0 0.0
      %410 = vmatpush.msra.mxu0 0.0
      %411 = vmatpush.msra.mxu0 0.0
      %412 = vmatpush.msra.mxu0 0.0
      %413 = vmatpush.msra.mxu0 0.0
      %414 = vmatpush.msra.mxu0 0.0
      %415 = vmatpush.msra.mxu0 0.0
      %416 = vmatpush.msra.mxu0 0.0
      %417 = vmatpush.msra.mxu0 0.0
      %418 = vmatpush.msra.mxu0 %v401
      %419 = vmatmul.f32.gmra.mxu0 %v353
      %v420 = vpop.f32.mrf.mxu0
      %v421 = vadd.f32 %v305, %v420
      %422 = vmatmul.f32.gmra.mxu0 %v356
      %v423 = vpop.f32.mrf.mxu0
      %v424 = vadd.f32 %v308, %v423
      %425 = vmatmul.f32.gmra.mxu0 %v359
      %v426 = vpop.f32.mrf.mxu0
      %v427 = vadd.f32 %v311, %v426
      %428 = vmatmul.f32.gmra.mxu0 %v362
      %v429 = vpop.f32.mrf.mxu0
      %v430 = vadd.f32 %v314, %v429
      %431 = vmatmul.f32.gmra.mxu0 %v365
      %v432 = vpop.f32.mrf.mxu0
      %v433 = vadd.f32 %v317, %v432
      %434 = vmatmul.f32.gmra.mxu0 %v368
      %v435 = vpop.f32.mrf.mxu0
      %v436 = vadd.f32 %v320, %v435
      %437 = vmatmul.f32.gmra.mxu0 %v371
      %v438 = vpop.f32.mrf.mxu0
      %v439 = vadd.f32 %v323, %v438
      %440 = vmatmul.f32.gmra.mxu0 %v374
      %v441 = vpop.f32.mrf.mxu0
      %v442 = vadd.f32 %v326, %v441
      %443 = vmatmul.f32.gmra.mxu0 %v377
      %v444 = vpop.f32.mrf.mxu0
      %v445 = vadd.f32 %v329, %v444
      %446 = vmatmul.f32.gmra.mxu0 %v380
      %v447 = vpop.f32.mrf.mxu0
      %v448 = vadd.f32 %v332, %v447
      %449 = vmatmul.f32.gmra.mxu0 %v383
      %v450 = vpop.f32.mrf.mxu0
      %v451 = vadd.f32 %v335, %v450
      %452 = vmatmul.f32.gmra.mxu0 %v386
      %v453 = vpop.f32.mrf.mxu0
      %v454 = vadd.f32 %v338, %v453
      %455 = vmatmul.f32.gmra.mxu0 %v389
      %v456 = vpop.f32.mrf.mxu0
      %v457 = vadd.f32 %v341, %v456
      %458 = vmatmul.f32.gmra.mxu0 %v392
      %v459 = vpop.f32.mrf.mxu0
      %v460 = vadd.f32 %v344, %v459
      %461 = vmatmul.f32.gmra.mxu0 %v395
      %v462 = vpop.f32.mrf.mxu0
      %v463 = vadd.f32 %v347, %v462
      %464 = vmatmul.f32.gmra.mxu0 %v398
      %v465 = vpop.f32.mrf.mxu0
      %v466 = vadd.f32 %v350, %v465
      %467 = vdwg.mxu0
      %v468 = vld [vmem:[%s198 + $0x2] sm:$0xff]
      %v469 = vld [vmem:[%s198 + $0xa] sm:$0xff]
      %v470 = vld [vmem:[%s198 + $0x1a] sm:$0xff]
      %v471 = vld [vmem:[%s198 + $0x22] sm:$0xff]
      %v472 = vld [vmem:[%s198 + $0x32] sm:$0xff]
      %v473 = vld [vmem:[%s198 + $0x3a] sm:$0xff]
      %v474 = vld [vmem:[%s198 + $0x4a] sm:$0xff]
      %v475 = vld [vmem:[%s198 + $0x52] sm:$0xff]
      %v476 = vld [vmem:[%s198 + $0x62] sm:$0xff]
      %v477 = vld [vmem:[%s198 + $0x6a] sm:$0xff]
      %v478 = vld [vmem:[%s198 + $0x7a] sm:$0xff]
      %v479 = vld [vmem:[%s198 + $0x82] sm:$0xff]
      %v480 = vld [vmem:[%s198 + $0x92] sm:$0xff]
      %v481 = vld [vmem:[%s198 + $0x9a] sm:$0xff]
      %v482 = vld [vmem:[%s198 + $0xaa] sm:$0xff]
      %v483 = vld [vmem:[%s198 + $0xb2] sm:$0xff]
      %s484 = scalar_lea.vmem %s1, 8
      %v485 = vld [vmem:[%s484] sm:$0xf]
      %v487 = vsel %vm234, %v468, 0
      %v490 = vsel %vm234, %v469, 0
      %v493 = vsel %vm234, %v470, 0
      %v496 = vsel %vm234, %v471, 0
      %v499 = vsel %vm234, %v472, 0
      %v502 = vsel %vm234, %v473, 0
      %v505 = vsel %vm234, %v474, 0
      %v508 = vsel %vm234, %v475, 0
      %v511 = vsel %vm234, %v476, 0
      %v514 = vsel %vm234, %v477, 0
      %v517 = vsel %vm234, %v478, 0
      %v520 = vsel %vm234, %v479, 0
      %v523 = vsel %vm234, %v480, 0
      %v526 = vsel %vm234, %v481, 0
      %v529 = vsel %vm234, %v482, 0
      %v532 = vsel %vm234, %v483, 0
      %v535 = vsel %vm283, %v485, 0
      %537 = vmatpush.msra.mxu0 0.0
      %538 = vmatpush.msra.mxu0 0.0
      %539 = vmatpush.msra.mxu0 0.0
      %540 = vmatpush.msra.mxu0 0.0
      %541 = vmatpush.msra.mxu0 0.0
      %542 = vmatpush.msra.mxu0 0.0
      %543 = vmatpush.msra.mxu0 0.0
      %544 = vmatpush.msra.mxu0 0.0
      %545 = vmatpush.msra.mxu0 0.0
      %546 = vmatpush.msra.mxu0 0.0
      %547 = vmatpush.msra.mxu0 0.0
      %548 = vmatpush.msra.mxu0 0.0
      %549 = vmatpush.msra.mxu0 0.0
      %550 = vmatpush.msra.mxu0 0.0
      %551 = vmatpush.msra.mxu0 0.0
      %552 = vmatpush.msra.mxu0 %v535
      %553 = vmatmul.f32.gmra.mxu0 %v487
      %v554 = vpop.f32.mrf.mxu0
      %v555 = vadd.f32 0.0, %v554
      %556 = vmatmul.f32.gmra.mxu0 %v490
      %v557 = vpop.f32.mrf.mxu0
      %v558 = vadd.f32 0.0, %v557
      %559 = vmatmul.f32.gmra.mxu0 %v493
      %v560 = vpop.f32.mrf.mxu0
      %v561 = vadd.f32 0.0, %v560
      %562 = vmatmul.f32.gmra.mxu0 %v496
      %v563 = vpop.f32.mrf.mxu0
      %v564 = vadd.f32 0.0, %v563
      %565 = vmatmul.f32.gmra.mxu0 %v499
      %v566 = vpop.f32.mrf.mxu0
      %v567 = vadd.f32 0.0, %v566
      %568 = vmatmul.f32.gmra.mxu0 %v502
      %v569 = vpop.f32.mrf.mxu0
      %v570 = vadd.f32 0.0, %v569
      %571 = vmatmul.f32.gmra.mxu0 %v505
      %v572 = vpop.f32.mrf.mxu0
      %v573 = vadd.f32 0.0, %v572
      %574 = vmatmul.f32.gmra.mxu0 %v508
      %v575 = vpop.f32.mrf.mxu0
      %v576 = vadd.f32 0.0, %v575
      %577 = vmatmul.f32.gmra.mxu0 %v511
      %v578 = vpop.f32.mrf.mxu0
      %v579 = vadd.f32 0.0, %v578
      %580 = vmatmul.f32.gmra.mxu0 %v514
      %v581 = vpop.f32.mrf.mxu0
      %v582 = vadd.f32 0.0, %v581
      %583 = vmatmul.f32.gmra.mxu0 %v517
      %v584 = vpop.f32.mrf.mxu0
      %v585 = vadd.f32 0.0, %v584
      %586 = vmatmul.f32.gmra.mxu0 %v520
      %v587 = vpop.f32.mrf.mxu0
      %v588 = vadd.f32 0.0, %v587
      %589 = vmatmul.f32.gmra.mxu0 %v523
      %v590 = vpop.f32.mrf.mxu0
      %v591 = vadd.f32 0.0, %v590
      %592 = vmatmul.f32.gmra.mxu0 %v526
      %v593 = vpop.f32.mrf.mxu0
      %v594 = vadd.f32 0.0, %v593
      %595 = vmatmul.f32.gmra.mxu0 %v529
      %v596 = vpop.f32.mrf.mxu0
      %v597 = vadd.f32 0.0, %v596
      %598 = vmatmul.f32.gmra.mxu0 %v532
      %v599 = vpop.f32.mrf.mxu0
      %v600 = vadd.f32 0.0, %v599
      %601 = vdwg.mxu0
      %v602 = vadd.f32 %v421, %v555
      %v603 = vadd.f32 %v424, %v558
      %v604 = vadd.f32 %v427, %v561
      %v605 = vadd.f32 %v430, %v564
      %v606 = vadd.f32 %v433, %v567
      %v607 = vadd.f32 %v436, %v570
      %v608 = vadd.f32 %v439, %v573
      %v609 = vadd.f32 %v442, %v576
      %v610 = vadd.f32 %v445, %v579
      %v611 = vadd.f32 %v448, %v582
      %v612 = vadd.f32 %v451, %v585
      %v613 = vadd.f32 %v454, %v588
      %v614 = vadd.f32 %v457, %v591
      %v615 = vadd.f32 %v460, %v594
      %v616 = vadd.f32 %v463, %v597
      %v617 = vadd.f32 %v466, %v600
      %s618 = sadd.s32 %s196, 1
      %s619 = smul.u32 %s618, 24
      %s620 = scalar_lea.vmem %s184, %s619
      %v621 = vld [vmem:[%s620] sm:$0xff]
      %v622 = vld [vmem:[%s620 + $0x8] sm:$0xff]
      %v623 = vld [vmem:[%s620 + $0x18] sm:$0xff]
      %v624 = vld [vmem:[%s620 + $0x20] sm:$0xff]
      %v625 = vld [vmem:[%s620 + $0x30] sm:$0xff]
      %v626 = vld [vmem:[%s620 + $0x38] sm:$0xff]
      %v627 = vld [vmem:[%s620 + $0x48] sm:$0xff]
      %v628 = vld [vmem:[%s620 + $0x50] sm:$0xff]
      %v629 = vld [vmem:[%s620 + $0x60] sm:$0xff]
      %v630 = vld [vmem:[%s620 + $0x68] sm:$0xff]
      %v631 = vld [vmem:[%s620 + $0x78] sm:$0xff]
      %v632 = vld [vmem:[%s620 + $0x80] sm:$0xff]
      %v633 = vld [vmem:[%s620 + $0x90] sm:$0xff]
      %v634 = vld [vmem:[%s620 + $0x98] sm:$0xff]
      %v635 = vld [vmem:[%s620 + $0xa8] sm:$0xff]
      %v636 = vld [vmem:[%s620 + $0xb0] sm:$0xff]
      %s637 = scalar_lea.vmem %s1, 12
      %v638 = vld [vmem:[%s637] sm:$0xf]
      %v640 = vsel %vm234, %v621, 0
      %v643 = vsel %vm234, %v622, 0
      %v646 = vsel %vm234, %v623, 0
      %v649 = vsel %vm234, %v624, 0
      %v652 = vsel %vm234, %v625, 0
      %v655 = vsel %vm234, %v626, 0
      %v658 = vsel %vm234, %v627, 0
      %v661 = vsel %vm234, %v628, 0
      %v664 = vsel %vm234, %v629, 0
      %v667 = vsel %vm234, %v630, 0
      %v670 = vsel %vm234, %v631, 0
      %v673 = vsel %vm234, %v632, 0
      %v676 = vsel %vm234, %v633, 0
      %v679 = vsel %vm234, %v634, 0
      %v682 = vsel %vm234, %v635, 0
      %v685 = vsel %vm234, %v636, 0
      %v688 = vsel %vm283, %v638, 0
      %690 = vmatpush.msra.mxu0 0.0
      %691 = vmatpush.msra.mxu0 0.0
      %692 = vmatpush.msra.mxu0 0.0
      %693 = vmatpush.msra.mxu0 0.0
      %694 = vmatpush.msra.mxu0 0.0
      %695 = vmatpush.msra.mxu0 0.0
      %696 = vmatpush.msra.mxu0 0.0
      %697 = vmatpush.msra.mxu0 0.0
      %698 = vmatpush.msra.mxu0 0.0
      %699 = vmatpush.msra.mxu0 0.0
      %700 = vmatpush.msra.mxu0 0.0
      %701 = vmatpush.msra.mxu0 0.0
      %702 = vmatpush.msra.mxu0 0.0
      %703 = vmatpush.msra.mxu0 0.0
      %704 = vmatpush.msra.mxu0 0.0
      %705 = vmatpush.msra.mxu0 %v688
      %706 = vmatmul.f32.gmra.mxu0 %v640
      %v707 = vpop.f32.mrf.mxu0
      %v708 = vadd.f32 0.0, %v707
      %709 = vmatmul.f32.gmra.mxu0 %v643
      %v710 = vpop.f32.mrf.mxu0
      %v711 = vadd.f32 0.0, %v710
      %712 = vmatmul.f32.gmra.mxu0 %v646
      %v713 = vpop.f32.mrf.mxu0
      %v714 = vadd.f32 0.0, %v713
      %715 = vmatmul.f32.gmra.mxu0 %v649
      %v716 = vpop.f32.mrf.mxu0
      %v717 = vadd.f32 0.0, %v716
      %718 = vmatmul.f32.gmra.mxu0 %v652
      %v719 = vpop.f32.mrf.mxu0
      %v720 = vadd.f32 0.0, %v719
      %721 = vmatmul.f32.gmra.mxu0 %v655
      %v722 = vpop.f32.mrf.mxu0
      %v723 = vadd.f32 0.0, %v722
      %724 = vmatmul.f32.gmra.mxu0 %v658
      %v725 = vpop.f32.mrf.mxu0
      %v726 = vadd.f32 0.0, %v725
      %727 = vmatmul.f32.gmra.mxu0 %v661
      %v728 = vpop.f32.mrf.mxu0
      %v729 = vadd.f32 0.0, %v728
      %730 = vmatmul.f32.gmra.mxu0 %v664
      %v731 = vpop.f32.mrf.mxu0
      %v732 = vadd.f32 0.0, %v731
      %733 = vmatmul.f32.gmra.mxu0 %v667
      %v734 = vpop.f32.mrf.mxu0
      %v735 = vadd.f32 0.0, %v734
      %736 = vmatmul.f32.gmra.mxu0 %v670
      %v737 = vpop.f32.mrf.mxu0
      %v738 = vadd.f32 0.0, %v737
      %739 = vmatmul.f32.gmra.mxu0 %v673
      %v740 = vpop.f32.mrf.mxu0
      %v741 = vadd.f32 0.0, %v740
      %742 = vmatmul.f32.gmra.mxu0 %v676
      %v743 = vpop.f32.mrf.mxu0
      %v744 = vadd.f32 0.0, %v743
      %745 = vmatmul.f32.gmra.mxu0 %v679
      %v746 = vpop.f32.mrf.mxu0
      %v747 = vadd.f32 0.0, %v746
      %748 = vmatmul.f32.gmra.mxu0 %v682
      %v749 = vpop.f32.mrf.mxu0
      %v750 = vadd.f32 0.0, %v749
      %751 = vmatmul.f32.gmra.mxu0 %v685
      %v752 = vpop.f32.mrf.mxu0
      %v753 = vadd.f32 0.0, %v752
      %754 = vdwg.mxu0
      %v755 = vadd.f32 %v602, %v708
      %v756 = vadd.f32 %v603, %v711
      %v757 = vadd.f32 %v604, %v714
      %v758 = vadd.f32 %v605, %v717
      %v759 = vadd.f32 %v606, %v720
      %v760 = vadd.f32 %v607, %v723
      %v761 = vadd.f32 %v608, %v726
      %v762 = vadd.f32 %v609, %v729
      %v763 = vadd.f32 %v610, %v732
      %v764 = vadd.f32 %v611, %v735
      %v765 = vadd.f32 %v612, %v738
      %v766 = vadd.f32 %v613, %v741
      %v767 = vadd.f32 %v614, %v744
      %v768 = vadd.f32 %v615, %v747
      %v769 = vadd.f32 %v616, %v750
      %v770 = vadd.f32 %v617, %v753
      %v771 = vld [vmem:[%s620 + $0x1] sm:$0xff]
      %v772 = vld [vmem:[%s620 + $0x9] sm:$0xff]
      %v773 = vld [vmem:[%s620 + $0x19] sm:$0xff]
      %v774 = vld [vmem:[%s620 + $0x21] sm:$0xff]
      %v775 = vld [vmem:[%s620 + $0x31] sm:$0xff]
      %v776 = vld [vmem:[%s620 + $0x39] sm:$0xff]
      %v777 = vld [vmem:[%s620 + $0x49] sm:$0xff]
      %v778 = vld [vmem:[%s620 + $0x51] sm:$0xff]
      %v779 = vld [vmem:[%s620 + $0x61] sm:$0xff]
      %v780 = vld [vmem:[%s620 + $0x69] sm:$0xff]
      %v781 = vld [vmem:[%s620 + $0x79] sm:$0xff]
      %v782 = vld [vmem:[%s620 + $0x81] sm:$0xff]
      %v783 = vld [vmem:[%s620 + $0x91] sm:$0xff]
      %v784 = vld [vmem:[%s620 + $0x99] sm:$0xff]
      %v785 = vld [vmem:[%s620 + $0xa9] sm:$0xff]
      %v786 = vld [vmem:[%s620 + $0xb1] sm:$0xff]
      %s787 = scalar_lea.vmem %s1, 16
      %v788 = vld [vmem:[%s787] sm:$0xf]
      %v790 = vsel %vm234, %v771, 0
      %v793 = vsel %vm234, %v772, 0
      %v796 = vsel %vm234, %v773, 0
      %v799 = vsel %vm234, %v774, 0
      %v802 = vsel %vm234, %v775, 0
      %v805 = vsel %vm234, %v776, 0
      %v808 = vsel %vm234, %v777, 0
      %v811 = vsel %vm234, %v778, 0
      %v814 = vsel %vm234, %v779, 0
      %v817 = vsel %vm234, %v780, 0
      %v820 = vsel %vm234, %v781, 0
      %v823 = vsel %vm234, %v782, 0
      %v826 = vsel %vm234, %v783, 0
      %v829 = vsel %vm234, %v784, 0
      %v832 = vsel %vm234, %v785, 0
      %v835 = vsel %vm234, %v786, 0
      %v838 = vsel %vm283, %v788, 0
      %840 = vmatpush.msra.mxu0 0.0
      %841 = vmatpush.msra.mxu0 0.0
      %842 = vmatpush.msra.mxu0 0.0
      %843 = vmatpush.msra.mxu0 0.0
      %844 = vmatpush.msra.mxu0 0.0
      %845 = vmatpush.msra.mxu0 0.0
      %846 = vmatpush.msra.mxu0 0.0
      %847 = vmatpush.msra.mxu0 0.0
      %848 = vmatpush.msra.mxu0 0.0
      %849 = vmatpush.msra.mxu0 0.0
      %850 = vmatpush.msra.mxu0 0.0
      %851 = vmatpush.msra.mxu0 0.0
      %852 = vmatpush.msra.mxu0 0.0
      %853 = vmatpush.msra.mxu0 0.0
      %854 = vmatpush.msra.mxu0 0.0
      %855 = vmatpush.msra.mxu0 %v838
      %856 = vmatmul.f32.gmra.mxu0 %v790
      %v857 = vpop.f32.mrf.mxu0
      %v858 = vadd.f32 0.0, %v857
      %859 = vmatmul.f32.gmra.mxu0 %v793
      %v860 = vpop.f32.mrf.mxu0
      %v861 = vadd.f32 0.0, %v860
      %862 = vmatmul.f32.gmra.mxu0 %v796
      %v863 = vpop.f32.mrf.mxu0
      %v864 = vadd.f32 0.0, %v863
      %865 = vmatmul.f32.gmra.mxu0 %v799
      %v866 = vpop.f32.mrf.mxu0
      %v867 = vadd.f32 0.0, %v866
      %868 = vmatmul.f32.gmra.mxu0 %v802
      %v869 = vpop.f32.mrf.mxu0
      %v870 = vadd.f32 0.0, %v869
      %871 = vmatmul.f32.gmra.mxu0 %v805
      %v872 = vpop.f32.mrf.mxu0
      %v873 = vadd.f32 0.0, %v872
      %874 = vmatmul.f32.gmra.mxu0 %v808
      %v875 = vpop.f32.mrf.mxu0
      %v876 = vadd.f32 0.0, %v875
      %877 = vmatmul.f32.gmra.mxu0 %v811
      %v878 = vpop.f32.mrf.mxu0
      %v879 = vadd.f32 0.0, %v878
      %880 = vmatmul.f32.gmra.mxu0 %v814
      %v881 = vpop.f32.mrf.mxu0
      %v882 = vadd.f32 0.0, %v881
      %883 = vmatmul.f32.gmra.mxu0 %v817
      %v884 = vpop.f32.mrf.mxu0
      %v885 = vadd.f32 0.0, %v884
      %886 = vmatmul.f32.gmra.mxu0 %v820
      %v887 = vpop.f32.mrf.mxu0
      %v888 = vadd.f32 0.0, %v887
      %889 = vmatmul.f32.gmra.mxu0 %v823
      %v890 = vpop.f32.mrf.mxu0
      %v891 = vadd.f32 0.0, %v890
      %892 = vmatmul.f32.gmra.mxu0 %v826
      %v893 = vpop.f32.mrf.mxu0
      %v894 = vadd.f32 0.0, %v893
      %895 = vmatmul.f32.gmra.mxu0 %v829
      %v896 = vpop.f32.mrf.mxu0
      %v897 = vadd.f32 0.0, %v896
      %898 = vmatmul.f32.gmra.mxu0 %v832
      %v899 = vpop.f32.mrf.mxu0
      %v900 = vadd.f32 0.0, %v899
      %901 = vmatmul.f32.gmra.mxu0 %v835
      %v902 = vpop.f32.mrf.mxu0
      %v903 = vadd.f32 0.0, %v902
      %904 = vdwg.mxu0
      %v905 = vadd.f32 %v755, %v858
      %v906 = vadd.f32 %v756, %v861
      %v907 = vadd.f32 %v757, %v864
      %v908 = vadd.f32 %v758, %v867
      %v909 = vadd.f32 %v759, %v870
      %v910 = vadd.f32 %v760, %v873
      %v911 = vadd.f32 %v761, %v876
      %v912 = vadd.f32 %v762, %v879
      %v913 = vadd.f32 %v763, %v882
      %v914 = vadd.f32 %v764, %v885
      %v915 = vadd.f32 %v765, %v888
      %v916 = vadd.f32 %v766, %v891
      %v917 = vadd.f32 %v767, %v894
      %v918 = vadd.f32 %v768, %v897
      %v919 = vadd.f32 %v769, %v900
      %v920 = vadd.f32 %v770, %v903
      %v921 = vld [vmem:[%s620 + $0x2] sm:$0xff]
      %v922 = vld [vmem:[%s620 + $0xa] sm:$0xff]
      %v923 = vld [vmem:[%s620 + $0x1a] sm:$0xff]
      %v924 = vld [vmem:[%s620 + $0x22] sm:$0xff]
      %v925 = vld [vmem:[%s620 + $0x32] sm:$0xff]
      %v926 = vld [vmem:[%s620 + $0x3a] sm:$0xff]
      %v927 = vld [vmem:[%s620 + $0x4a] sm:$0xff]
      %v928 = vld [vmem:[%s620 + $0x52] sm:$0xff]
      %v929 = vld [vmem:[%s620 + $0x62] sm:$0xff]
      %v930 = vld [vmem:[%s620 + $0x6a] sm:$0xff]
      %v931 = vld [vmem:[%s620 + $0x7a] sm:$0xff]
      %v932 = vld [vmem:[%s620 + $0x82] sm:$0xff]
      %v933 = vld [vmem:[%s620 + $0x92] sm:$0xff]
      %v934 = vld [vmem:[%s620 + $0x9a] sm:$0xff]
      %v935 = vld [vmem:[%s620 + $0xaa] sm:$0xff]
      %v936 = vld [vmem:[%s620 + $0xb2] sm:$0xff]
      %s937 = scalar_lea.vmem %s1, 20
      %v938 = vld [vmem:[%s937] sm:$0xf]
      %v940 = vsel %vm234, %v921, 0
      %v943 = vsel %vm234, %v922, 0
      %v946 = vsel %vm234, %v923, 0
      %v949 = vsel %vm234, %v924, 0
      %v952 = vsel %vm234, %v925, 0
      %v955 = vsel %vm234, %v926, 0
      %v958 = vsel %vm234, %v927, 0
      %v961 = vsel %vm234, %v928, 0
      %v964 = vsel %vm234, %v929, 0
      %v967 = vsel %vm234, %v930, 0
      %v970 = vsel %vm234, %v931, 0
      %v973 = vsel %vm234, %v932, 0
      %v976 = vsel %vm234, %v933, 0
      %v979 = vsel %vm234, %v934, 0
      %v982 = vsel %vm234, %v935, 0
      %v985 = vsel %vm234, %v936, 0
      %v988 = vsel %vm283, %v938, 0
      %990 = vmatpush.msra.mxu0 0.0
      %991 = vmatpush.msra.mxu0 0.0
      %992 = vmatpush.msra.mxu0 0.0
      %993 = vmatpush.msra.mxu0 0.0
      %994 = vmatpush.msra.mxu0 0.0
      %995 = vmatpush.msra.mxu0 0.0
      %996 = vmatpush.msra.mxu0 0.0
      %997 = vmatpush.msra.mxu0 0.0
      %998 = vmatpush.msra.mxu0 0.0
      %999 = vmatpush.msra.mxu0 0.0
      %1000 = vmatpush.msra.mxu0 0.0
      %1001 = vmatpush.msra.mxu0 0.0
      %1002 = vmatpush.msra.mxu0 0.0
      %1003 = vmatpush.msra.mxu0 0.0
      %1004 = vmatpush.msra.mxu0 0.0
      %1005 = vmatpush.msra.mxu0 %v988
      %1006 = vmatmul.f32.gmra.mxu0 %v940
      %v1007 = vpop.f32.mrf.mxu0
      %v1008 = vadd.f32 0.0, %v1007
      %1009 = vmatmul.f32.gmra.mxu0 %v943
      %v1010 = vpop.f32.mrf.mxu0
      %v1011 = vadd.f32 0.0, %v1010
      %1012 = vmatmul.f32.gmra.mxu0 %v946
      %v1013 = vpop.f32.mrf.mxu0
      %v1014 = vadd.f32 0.0, %v1013
      %1015 = vmatmul.f32.gmra.mxu0 %v949
      %v1016 = vpop.f32.mrf.mxu0
      %v1017 = vadd.f32 0.0, %v1016
      %1018 = vmatmul.f32.gmra.mxu0 %v952
      %v1019 = vpop.f32.mrf.mxu0
      %v1020 = vadd.f32 0.0, %v1019
      %1021 = vmatmul.f32.gmra.mxu0 %v955
      %v1022 = vpop.f32.mrf.mxu0
      %v1023 = vadd.f32 0.0, %v1022
      %1024 = vmatmul.f32.gmra.mxu0 %v958
      %v1025 = vpop.f32.mrf.mxu0
      %v1026 = vadd.f32 0.0, %v1025
      %1027 = vmatmul.f32.gmra.mxu0 %v961
      %v1028 = vpop.f32.mrf.mxu0
      %v1029 = vadd.f32 0.0, %v1028
      %1030 = vmatmul.f32.gmra.mxu0 %v964
      %v1031 = vpop.f32.mrf.mxu0
      %v1032 = vadd.f32 0.0, %v1031
      %1033 = vmatmul.f32.gmra.mxu0 %v967
      %v1034 = vpop.f32.mrf.mxu0
      %v1035 = vadd.f32 0.0, %v1034
      %1036 = vmatmul.f32.gmra.mxu0 %v970
      %v1037 = vpop.f32.mrf.mxu0
      %v1038 = vadd.f32 0.0, %v1037
      %1039 = vmatmul.f32.gmra.mxu0 %v973
      %v1040 = vpop.f32.mrf.mxu0
      %v1041 = vadd.f32 0.0, %v1040
      %1042 = vmatmul.f32.gmra.mxu0 %v976
      %v1043 = vpop.f32.mrf.mxu0
      %v1044 = vadd.f32 0.0, %v1043
      %1045 = vmatmul.f32.gmra.mxu0 %v979
      %v1046 = vpop.f32.mrf.mxu0
      %v1047 = vadd.f32 0.0, %v1046
      %1048 = vmatmul.f32.gmra.mxu0 %v982
      %v1049 = vpop.f32.mrf.mxu0
      %v1050 = vadd.f32 0.0, %v1049
      %1051 = vmatmul.f32.gmra.mxu0 %v985
      %v1052 = vpop.f32.mrf.mxu0
      %v1053 = vadd.f32 0.0, %v1052
      %1054 = vdwg.mxu0
      %v1055 = vadd.f32 %v905, %v1008
      %v1056 = vadd.f32 %v906, %v1011
      %v1057 = vadd.f32 %v907, %v1014
      %v1058 = vadd.f32 %v908, %v1017
      %v1059 = vadd.f32 %v909, %v1020
      %v1060 = vadd.f32 %v910, %v1023
      %v1061 = vadd.f32 %v911, %v1026
      %v1062 = vadd.f32 %v912, %v1029
      %v1063 = vadd.f32 %v913, %v1032
      %v1064 = vadd.f32 %v914, %v1035
      %v1065 = vadd.f32 %v915, %v1038
      %v1066 = vadd.f32 %v916, %v1041
      %v1067 = vadd.f32 %v917, %v1044
      %v1068 = vadd.f32 %v918, %v1047
      %v1069 = vadd.f32 %v919, %v1050
      %v1070 = vadd.f32 %v920, %v1053
      %s1071 = sadd.s32 %s196, 2
      %s1072 = smul.u32 %s1071, 24
      %s1073 = scalar_lea.vmem %s184, %s1072
      %v1074 = vld [vmem:[%s1073] sm:$0xff]
      %v1075 = vld [vmem:[%s1073 + $0x8] sm:$0xff]
      %v1076 = vld [vmem:[%s1073 + $0x18] sm:$0xff]
      %v1077 = vld [vmem:[%s1073 + $0x20] sm:$0xff]
      %v1078 = vld [vmem:[%s1073 + $0x30] sm:$0xff]
      %v1079 = vld [vmem:[%s1073 + $0x38] sm:$0xff]
      %v1080 = vld [vmem:[%s1073 + $0x48] sm:$0xff]
      %v1081 = vld [vmem:[%s1073 + $0x50] sm:$0xff]
      %v1082 = vld [vmem:[%s1073 + $0x60] sm:$0xff]
      %v1083 = vld [vmem:[%s1073 + $0x68] sm:$0xff]
      %v1084 = vld [vmem:[%s1073 + $0x78] sm:$0xff]
      %v1085 = vld [vmem:[%s1073 + $0x80] sm:$0xff]
      %v1086 = vld [vmem:[%s1073 + $0x90] sm:$0xff]
      %v1087 = vld [vmem:[%s1073 + $0x98] sm:$0xff]
      %v1088 = vld [vmem:[%s1073 + $0xa8] sm:$0xff]
      %v1089 = vld [vmem:[%s1073 + $0xb0] sm:$0xff]
      %s1090 = scalar_lea.vmem %s1, 24
      %v1091 = vld [vmem:[%s1090] sm:$0xf]
      %v1093 = vsel %vm234, %v1074, 0
      %v1096 = vsel %vm234, %v1075, 0
      %v1099 = vsel %vm234, %v1076, 0
      %v1102 = vsel %vm234, %v1077, 0
      %v1105 = vsel %vm234, %v1078, 0
      %v1108 = vsel %vm234, %v1079, 0
      %v1111 = vsel %vm234, %v1080, 0
      %v1114 = vsel %vm234, %v1081, 0
      %v1117 = vsel %vm234, %v1082, 0
      %v1120 = vsel %vm234, %v1083, 0
      %v1123 = vsel %vm234, %v1084, 0
      %v1126 = vsel %vm234, %v1085, 0
      %v1129 = vsel %vm234, %v1086, 0
      %v1132 = vsel %vm234, %v1087, 0
      %v1135 = vsel %vm234, %v1088, 0
      %v1138 = vsel %vm234, %v1089, 0
      %v1141 = vsel %vm283, %v1091, 0
      %1143 = vmatpush.msra.mxu0 0.0
      %1144 = vmatpush.msra.mxu0 0.0
      %1145 = vmatpush.msra.mxu0 0.0
      %1146 = vmatpush.msra.mxu0 0.0
      %1147 = vmatpush.msra.mxu0 0.0
      %1148 = vmatpush.msra.mxu0 0.0
      %1149 = vmatpush.msra.mxu0 0.0
      %1150 = vmatpush.msra.mxu0 0.0
      %1151 = vmatpush.msra.mxu0 0.0
      %1152 = vmatpush.msra.mxu0 0.0
      %1153 = vmatpush.msra.mxu0 0.0
      %1154 = vmatpush.msra.mxu0 0.0
      %1155 = vmatpush.msra.mxu0 0.0
      %1156 = vmatpush.msra.mxu0 0.0
      %1157 = vmatpush.msra.mxu0 0.0
      %1158 = vmatpush.msra.mxu0 %v1141
      %1159 = vmatmul.f32.gmra.mxu0 %v1093
      %v1160 = vpop.f32.mrf.mxu0
      %v1161 = vadd.f32 0.0, %v1160
      %1162 = vmatmul.f32.gmra.mxu0 %v1096
      %v1163 = vpop.f32.mrf.mxu0
      %v1164 = vadd.f32 0.0, %v1163
      %1165 = vmatmul.f32.gmra.mxu0 %v1099
      %v1166 = vpop.f32.mrf.mxu0
      %v1167 = vadd.f32 0.0, %v1166
      %1168 = vmatmul.f32.gmra.mxu0 %v1102
      %v1169 = vpop.f32.mrf.mxu0
      %v1170 = vadd.f32 0.0, %v1169
      %1171 = vmatmul.f32.gmra.mxu0 %v1105
      %v1172 = vpop.f32.mrf.mxu0
      %v1173 = vadd.f32 0.0, %v1172
      %1174 = vmatmul.f32.gmra.mxu0 %v1108
      %v1175 = vpop.f32.mrf.mxu0
      %v1176 = vadd.f32 0.0, %v1175
      %1177 = vmatmul.f32.gmra.mxu0 %v1111
      %v1178 = vpop.f32.mrf.mxu0
      %v1179 = vadd.f32 0.0, %v1178
      %1180 = vmatmul.f32.gmra.mxu0 %v1114
      %v1181 = vpop.f32.mrf.mxu0
      %v1182 = vadd.f32 0.0, %v1181
      %1183 = vmatmul.f32.gmra.mxu0 %v1117
      %v1184 = vpop.f32.mrf.mxu0
      %v1185 = vadd.f32 0.0, %v1184
      %1186 = vmatmul.f32.gmra.mxu0 %v1120
      %v1187 = vpop.f32.mrf.mxu0
      %v1188 = vadd.f32 0.0, %v1187
      %1189 = vmatmul.f32.gmra.mxu0 %v1123
      %v1190 = vpop.f32.mrf.mxu0
      %v1191 = vadd.f32 0.0, %v1190
      %1192 = vmatmul.f32.gmra.mxu0 %v1126
      %v1193 = vpop.f32.mrf.mxu0
      %v1194 = vadd.f32 0.0, %v1193
      %1195 = vmatmul.f32.gmra.mxu0 %v1129
      %v1196 = vpop.f32.mrf.mxu0
      %v1197 = vadd.f32 0.0, %v1196
      %1198 = vmatmul.f32.gmra.mxu0 %v1132
      %v1199 = vpop.f32.mrf.mxu0
      %v1200 = vadd.f32 0.0, %v1199
      %1201 = vmatmul.f32.gmra.mxu0 %v1135
      %v1202 = vpop.f32.mrf.mxu0
      %v1203 = vadd.f32 0.0, %v1202
      %1204 = vmatmul.f32.gmra.mxu0 %v1138
      %v1205 = vpop.f32.mrf.mxu0
      %v1206 = vadd.f32 0.0, %v1205
      %1207 = vdwg.mxu0
      %v1208 = vadd.f32 %v1055, %v1161
      %v1209 = vadd.f32 %v1056, %v1164
      %v1210 = vadd.f32 %v1057, %v1167
      %v1211 = vadd.f32 %v1058, %v1170
      %v1212 = vadd.f32 %v1059, %v1173
      %v1213 = vadd.f32 %v1060, %v1176
      %v1214 = vadd.f32 %v1061, %v1179
      %v1215 = vadd.f32 %v1062, %v1182
      %v1216 = vadd.f32 %v1063, %v1185
      %v1217 = vadd.f32 %v1064, %v1188
      %v1218 = vadd.f32 %v1065, %v1191
      %v1219 = vadd.f32 %v1066, %v1194
      %v1220 = vadd.f32 %v1067, %v1197
      %v1221 = vadd.f32 %v1068, %v1200
      %v1222 = vadd.f32 %v1069, %v1203
      %v1223 = vadd.f32 %v1070, %v1206
      %v1224 = vld [vmem:[%s1073 + $0x1] sm:$0xff]
      %v1225 = vld [vmem:[%s1073 + $0x9] sm:$0xff]
      %v1226 = vld [vmem:[%s1073 + $0x19] sm:$0xff]
      %v1227 = vld [vmem:[%s1073 + $0x21] sm:$0xff]
      %v1228 = vld [vmem:[%s1073 + $0x31] sm:$0xff]
      %v1229 = vld [vmem:[%s1073 + $0x39] sm:$0xff]
      %v1230 = vld [vmem:[%s1073 + $0x49] sm:$0xff]
      %v1231 = vld [vmem:[%s1073 + $0x51] sm:$0xff]
      %v1232 = vld [vmem:[%s1073 + $0x61] sm:$0xff]
      %v1233 = vld [vmem:[%s1073 + $0x69] sm:$0xff]
      %v1234 = vld [vmem:[%s1073 + $0x79] sm:$0xff]
      %v1235 = vld [vmem:[%s1073 + $0x81] sm:$0xff]
      %v1236 = vld [vmem:[%s1073 + $0x91] sm:$0xff]
      %v1237 = vld [vmem:[%s1073 + $0x99] sm:$0xff]
      %v1238 = vld [vmem:[%s1073 + $0xa9] sm:$0xff]
      %v1239 = vld [vmem:[%s1073 + $0xb1] sm:$0xff]
      %s1240 = scalar_lea.vmem %s1, 28
      %v1241 = vld [vmem:[%s1240] sm:$0xf]
      %v1243 = vsel %vm234, %v1224, 0
      %v1246 = vsel %vm234, %v1225, 0
      %v1249 = vsel %vm234, %v1226, 0
      %v1252 = vsel %vm234, %v1227, 0
      %v1255 = vsel %vm234, %v1228, 0
      %v1258 = vsel %vm234, %v1229, 0
      %v1261 = vsel %vm234, %v1230, 0
      %v1264 = vsel %vm234, %v1231, 0
      %v1267 = vsel %vm234, %v1232, 0
      %v1270 = vsel %vm234, %v1233, 0
      %v1273 = vsel %vm234, %v1234, 0
      %v1276 = vsel %vm234, %v1235, 0
      %v1279 = vsel %vm234, %v1236, 0
      %v1282 = vsel %vm234, %v1237, 0
      %v1285 = vsel %vm234, %v1238, 0
      %v1288 = vsel %vm234, %v1239, 0
      %v1291 = vsel %vm283, %v1241, 0
      %1293 = vmatpush.msra.mxu0 0.0
      %1294 = vmatpush.msra.mxu0 0.0
      %1295 = vmatpush.msra.mxu0 0.0
      %1296 = vmatpush.msra.mxu0 0.0
      %1297 = vmatpush.msra.mxu0 0.0
      %1298 = vmatpush.msra.mxu0 0.0
      %1299 = vmatpush.msra.mxu0 0.0
      %1300 = vmatpush.msra.mxu0 0.0
      %1301 = vmatpush.msra.mxu0 0.0
      %1302 = vmatpush.msra.mxu0 0.0
      %1303 = vmatpush.msra.mxu0 0.0
      %1304 = vmatpush.msra.mxu0 0.0
      %1305 = vmatpush.msra.mxu0 0.0
      %1306 = vmatpush.msra.mxu0 0.0
      %1307 = vmatpush.msra.mxu0 0.0
      %1308 = vmatpush.msra.mxu0 %v1291
      %1309 = vmatmul.f32.gmra.mxu0 %v1243
      %v1310 = vpop.f32.mrf.mxu0
      %v1311 = vadd.f32 0.0, %v1310
      %1312 = vmatmul.f32.gmra.mxu0 %v1246
      %v1313 = vpop.f32.mrf.mxu0
      %v1314 = vadd.f32 0.0, %v1313
      %1315 = vmatmul.f32.gmra.mxu0 %v1249
      %v1316 = vpop.f32.mrf.mxu0
      %v1317 = vadd.f32 0.0, %v1316
      %1318 = vmatmul.f32.gmra.mxu0 %v1252
      %v1319 = vpop.f32.mrf.mxu0
      %v1320 = vadd.f32 0.0, %v1319
      %1321 = vmatmul.f32.gmra.mxu0 %v1255
      %v1322 = vpop.f32.mrf.mxu0
      %v1323 = vadd.f32 0.0, %v1322
      %1324 = vmatmul.f32.gmra.mxu0 %v1258
      %v1325 = vpop.f32.mrf.mxu0
      %v1326 = vadd.f32 0.0, %v1325
      %1327 = vmatmul.f32.gmra.mxu0 %v1261
      %v1328 = vpop.f32.mrf.mxu0
      %v1329 = vadd.f32 0.0, %v1328
      %1330 = vmatmul.f32.gmra.mxu0 %v1264
      %v1331 = vpop.f32.mrf.mxu0
      %v1332 = vadd.f32 0.0, %v1331
      %1333 = vmatmul.f32.gmra.mxu0 %v1267
      %v1334 = vpop.f32.mrf.mxu0
      %v1335 = vadd.f32 0.0, %v1334
      %1336 = vmatmul.f32.gmra.mxu0 %v1270
      %v1337 = vpop.f32.mrf.mxu0
      %v1338 = vadd.f32 0.0, %v1337
      %1339 = vmatmul.f32.gmra.mxu0 %v1273
      %v1340 = vpop.f32.mrf.mxu0
      %v1341 = vadd.f32 0.0, %v1340
      %1342 = vmatmul.f32.gmra.mxu0 %v1276
      %v1343 = vpop.f32.mrf.mxu0
      %v1344 = vadd.f32 0.0, %v1343
      %1345 = vmatmul.f32.gmra.mxu0 %v1279
      %v1346 = vpop.f32.mrf.mxu0
      %v1347 = vadd.f32 0.0, %v1346
      %1348 = vmatmul.f32.gmra.mxu0 %v1282
      %v1349 = vpop.f32.mrf.mxu0
      %v1350 = vadd.f32 0.0, %v1349
      %1351 = vmatmul.f32.gmra.mxu0 %v1285
      %v1352 = vpop.f32.mrf.mxu0
      %v1353 = vadd.f32 0.0, %v1352
      %1354 = vmatmul.f32.gmra.mxu0 %v1288
      %v1355 = vpop.f32.mrf.mxu0
      %v1356 = vadd.f32 0.0, %v1355
      %1357 = vdwg.mxu0
      %v1358 = vadd.f32 %v1208, %v1311
      %v1359 = vadd.f32 %v1209, %v1314
      %v1360 = vadd.f32 %v1210, %v1317
      %v1361 = vadd.f32 %v1211, %v1320
      %v1362 = vadd.f32 %v1212, %v1323
      %v1363 = vadd.f32 %v1213, %v1326
      %v1364 = vadd.f32 %v1214, %v1329
      %v1365 = vadd.f32 %v1215, %v1332
      %v1366 = vadd.f32 %v1216, %v1335
      %v1367 = vadd.f32 %v1217, %v1338
      %v1368 = vadd.f32 %v1218, %v1341
      %v1369 = vadd.f32 %v1219, %v1344
      %v1370 = vadd.f32 %v1220, %v1347
      %v1371 = vadd.f32 %v1221, %v1350
      %v1372 = vadd.f32 %v1222, %v1353
      %v1373 = vadd.f32 %v1223, %v1356
      %v1374 = vld [vmem:[%s1073 + $0x2] sm:$0xff]
      %v1375 = vld [vmem:[%s1073 + $0xa] sm:$0xff]
      %v1376 = vld [vmem:[%s1073 + $0x1a] sm:$0xff]
      %v1377 = vld [vmem:[%s1073 + $0x22] sm:$0xff]
      %v1378 = vld [vmem:[%s1073 + $0x32] sm:$0xff]
      %v1379 = vld [vmem:[%s1073 + $0x3a] sm:$0xff]
      %v1380 = vld [vmem:[%s1073 + $0x4a] sm:$0xff]
      %v1381 = vld [vmem:[%s1073 + $0x52] sm:$0xff]
      %v1382 = vld [vmem:[%s1073 + $0x62] sm:$0xff]
      %v1383 = vld [vmem:[%s1073 + $0x6a] sm:$0xff]
      %v1384 = vld [vmem:[%s1073 + $0x7a] sm:$0xff]
      %v1385 = vld [vmem:[%s1073 + $0x82] sm:$0xff]
      %v1386 = vld [vmem:[%s1073 + $0x92] sm:$0xff]
      %v1387 = vld [vmem:[%s1073 + $0x9a] sm:$0xff]
      %v1388 = vld [vmem:[%s1073 + $0xaa] sm:$0xff]
      %v1389 = vld [vmem:[%s1073 + $0xb2] sm:$0xff]
      %s1390 = scalar_lea.vmem %s1, 32
      %v1391 = vld [vmem:[%s1390] sm:$0xf]
      %v1393 = vsel %vm234, %v1374, 0
      %v1396 = vsel %vm234, %v1375, 0
      %v1399 = vsel %vm234, %v1376, 0
      %v1402 = vsel %vm234, %v1377, 0
      %v1405 = vsel %vm234, %v1378, 0
      %v1408 = vsel %vm234, %v1379, 0
      %v1411 = vsel %vm234, %v1380, 0
      %v1414 = vsel %vm234, %v1381, 0
      %v1417 = vsel %vm234, %v1382, 0
      %v1420 = vsel %vm234, %v1383, 0
      %v1423 = vsel %vm234, %v1384, 0
      %v1426 = vsel %vm234, %v1385, 0
      %v1429 = vsel %vm234, %v1386, 0
      %v1432 = vsel %vm234, %v1387, 0
      %v1435 = vsel %vm234, %v1388, 0
      %v1438 = vsel %vm234, %v1389, 0
      %v1441 = vsel %vm283, %v1391, 0
      %1443 = vmatpush.msra.mxu0 0.0
      %1444 = vmatpush.msra.mxu0 0.0
      %1445 = vmatpush.msra.mxu0 0.0
      %1446 = vmatpush.msra.mxu0 0.0
      %1447 = vmatpush.msra.mxu0 0.0
      %1448 = vmatpush.msra.mxu0 0.0
      %1449 = vmatpush.msra.mxu0 0.0
      %1450 = vmatpush.msra.mxu0 0.0
      %1451 = vmatpush.msra.mxu0 0.0
      %1452 = vmatpush.msra.mxu0 0.0
      %1453 = vmatpush.msra.mxu0 0.0
      %1454 = vmatpush.msra.mxu0 0.0
      %1455 = vmatpush.msra.mxu0 0.0
      %1456 = vmatpush.msra.mxu0 0.0
      %1457 = vmatpush.msra.mxu0 0.0
      %1458 = vmatpush.msra.mxu0 %v1441
      %1459 = vmatmul.f32.gmra.mxu0 %v1393
      %v1460 = vpop.f32.mrf.mxu0
      %v1461 = vadd.f32 0.0, %v1460
      %1462 = vmatmul.f32.gmra.mxu0 %v1396
      %v1463 = vpop.f32.mrf.mxu0
      %v1464 = vadd.f32 0.0, %v1463
      %1465 = vmatmul.f32.gmra.mxu0 %v1399
      %v1466 = vpop.f32.mrf.mxu0
      %v1467 = vadd.f32 0.0, %v1466
      %1468 = vmatmul.f32.gmra.mxu0 %v1402
      %v1469 = vpop.f32.mrf.mxu0
      %v1470 = vadd.f32 0.0, %v1469
      %1471 = vmatmul.f32.gmra.mxu0 %v1405
      %v1472 = vpop.f32.mrf.mxu0
      %v1473 = vadd.f32 0.0, %v1472
      %1474 = vmatmul.f32.gmra.mxu0 %v1408
      %v1475 = vpop.f32.mrf.mxu0
      %v1476 = vadd.f32 0.0, %v1475
      %1477 = vmatmul.f32.gmra.mxu0 %v1411
      %v1478 = vpop.f32.mrf.mxu0
      %v1479 = vadd.f32 0.0, %v1478
      %1480 = vmatmul.f32.gmra.mxu0 %v1414
      %v1481 = vpop.f32.mrf.mxu0
      %v1482 = vadd.f32 0.0, %v1481
      %1483 = vmatmul.f32.gmra.mxu0 %v1417
      %v1484 = vpop.f32.mrf.mxu0
      %v1485 = vadd.f32 0.0, %v1484
      %1486 = vmatmul.f32.gmra.mxu0 %v1420
      %v1487 = vpop.f32.mrf.mxu0
      %v1488 = vadd.f32 0.0, %v1487
      %1489 = vmatmul.f32.gmra.mxu0 %v1423
      %v1490 = vpop.f32.mrf.mxu0
      %v1491 = vadd.f32 0.0, %v1490
      %1492 = vmatmul.f32.gmra.mxu0 %v1426
      %v1493 = vpop.f32.mrf.mxu0
      %v1494 = vadd.f32 0.0, %v1493
      %1495 = vmatmul.f32.gmra.mxu0 %v1429
      %v1496 = vpop.f32.mrf.mxu0
      %v1497 = vadd.f32 0.0, %v1496
      %1498 = vmatmul.f32.gmra.mxu0 %v1432
      %v1499 = vpop.f32.mrf.mxu0
      %v1500 = vadd.f32 0.0, %v1499
      %1501 = vmatmul.f32.gmra.mxu0 %v1435
      %v1502 = vpop.f32.mrf.mxu0
      %v1503 = vadd.f32 0.0, %v1502
      %1504 = vmatmul.f32.gmra.mxu0 %v1438
      %v1505 = vpop.f32.mrf.mxu0
      %v1506 = vadd.f32 0.0, %v1505
      %1507 = vdwg.mxu0
      %v1508 = vadd.f32 %v1358, %v1461
      %v1509 = vadd.f32 %v1359, %v1464
      %v1510 = vadd.f32 %v1360, %v1467
      %v1511 = vadd.f32 %v1361, %v1470
      %v1512 = vadd.f32 %v1362, %v1473
      %v1513 = vadd.f32 %v1363, %v1476
      %v1514 = vadd.f32 %v1364, %v1479
      %v1515 = vadd.f32 %v1365, %v1482
      %v1516 = vadd.f32 %v1366, %v1485
      %v1517 = vadd.f32 %v1367, %v1488
      %v1518 = vadd.f32 %v1368, %v1491
      %v1519 = vadd.f32 %v1369, %v1494
      %v1520 = vadd.f32 %v1370, %v1497
      %v1521 = vadd.f32 %v1371, %v1500
      %v1522 = vadd.f32 %v1372, %v1503
      %v1523 = vadd.f32 %v1373, %v1506
      %v1524 = vld [vmem:[%s2] sm:$0x1]
      %v1526 = vperm.slane %v1524, 0
      %v1528 = vadd.f32 %v1508, %v1526
      %v1529 = vadd.f32 %v1509, %v1526
      %v1530 = vadd.f32 %v1510, %v1526
      %v1531 = vadd.f32 %v1511, %v1526
      %v1532 = vadd.f32 %v1512, %v1526
      %v1533 = vadd.f32 %v1513, %v1526
      %v1534 = vadd.f32 %v1514, %v1526
      %v1535 = vadd.f32 %v1515, %v1526
      %v1536 = vadd.f32 %v1516, %v1526
      %v1537 = vadd.f32 %v1517, %v1526
      %v1538 = vadd.f32 %v1518, %v1526
      %v1539 = vadd.f32 %v1519, %v1526
      %v1540 = vadd.f32 %v1520, %v1526
      %v1541 = vadd.f32 %v1521, %v1526
      %v1542 = vadd.f32 %v1522, %v1526
      %v1543 = vadd.f32 %v1523, %v1526
      %v1544 = vmax.f32 %v1528, 0.0
      %v1545 = vmax.f32 %v1529, 0.0
      %v1546 = vmax.f32 %v1530, 0.0
      %v1547 = vmax.f32 %v1531, 0.0
      %v1548 = vmax.f32 %v1532, 0.0
      %v1549 = vmax.f32 %v1533, 0.0
      %v1550 = vmax.f32 %v1534, 0.0
      %v1551 = vmax.f32 %v1535, 0.0
      %v1552 = vmax.f32 %v1536, 0.0
      %v1553 = vmax.f32 %v1537, 0.0
      %v1554 = vmax.f32 %v1538, 0.0
      %v1555 = vmax.f32 %v1539, 0.0
      %v1556 = vmax.f32 %v1540, 0.0
      %v1557 = vmax.f32 %v1541, 0.0
      %v1558 = vmax.f32 %v1542, 0.0
      %v1559 = vmax.f32 %v1543, 0.0
      %vm1560 = vcmask 130048
      %1561 = vst.msk [vmem:[%s192] sm:$0xff] %vm1560, %v1544
      %1562 = vst.msk [vmem:[%s192 + $0x8] sm:$0xff] %vm1560, %v1545
      %1563 = vst.msk [vmem:[%s192 + $0x20] sm:$0xff] %vm1560, %v1546
      %1564 = vst.msk [vmem:[%s192 + $0x28] sm:$0xff] %vm1560, %v1547
      %1565 = vst.msk [vmem:[%s192 + $0x40] sm:$0xff] %vm1560, %v1548
      %1566 = vst.msk [vmem:[%s192 + $0x48] sm:$0xff] %vm1560, %v1549
      %1567 = vst.msk [vmem:[%s192 + $0x60] sm:$0xff] %vm1560, %v1550
      %1568 = vst.msk [vmem:[%s192 + $0x68] sm:$0xff] %vm1560, %v1551
      %1569 = vst.msk [vmem:[%s192 + $0x80] sm:$0xff] %vm1560, %v1552
      %1570 = vst.msk [vmem:[%s192 + $0x88] sm:$0xff] %vm1560, %v1553
      %1571 = vst.msk [vmem:[%s192 + $0xa0] sm:$0xff] %vm1560, %v1554
      %1572 = vst.msk [vmem:[%s192 + $0xa8] sm:$0xff] %vm1560, %v1555
      %1573 = vst.msk [vmem:[%s192 + $0xc0] sm:$0xff] %vm1560, %v1556
      %1574 = vst.msk [vmem:[%s192 + $0xc8] sm:$0xff] %vm1560, %v1557
      %1575 = vst.msk [vmem:[%s192 + $0xe0] sm:$0xff] %vm1560, %v1558
      %1576 = vst.msk [vmem:[%s192 + $0xe8] sm:$0xff] %vm1560, %v1559
      %1593 = vrot.lane.b32.xlu0 %v1544, 112
      %v1594 = vpop.permute.xlu0 %1593
      %1595 = vrot.lane.b32.xlu0 %v1545, 112
      %v1596 = vpop.permute.xlu0 %1595
      %1597 = vrot.lane.b32.xlu0 %v1546, 112
      %v1598 = vpop.permute.xlu0 %1597
      %1599 = vrot.lane.b32.xlu0 %v1547, 112
      %v1600 = vpop.permute.xlu0 %1599
      %1601 = vrot.lane.b32.xlu0 %v1548, 112
      %v1602 = vpop.permute.xlu0 %1601
      %1603 = vrot.lane.b32.xlu0 %v1549, 112
      %v1604 = vpop.permute.xlu0 %1603
      %1605 = vrot.lane.b32.xlu0 %v1550, 112
      %v1606 = vpop.permute.xlu0 %1605
      %1607 = vrot.lane.b32.xlu0 %v1551, 112
      %v1608 = vpop.permute.xlu0 %1607
      %1609 = vrot.lane.b32.xlu0 %v1552, 112
      %v1610 = vpop.permute.xlu0 %1609
      %1611 = vrot.lane.b32.xlu0 %v1553, 112
      %v1612 = vpop.permute.xlu0 %1611
      %1613 = vrot.lane.b32.xlu0 %v1554, 112
      %v1614 = vpop.permute.xlu0 %1613
      %1615 = vrot.lane.b32.xlu0 %v1555, 112
      %v1616 = vpop.permute.xlu0 %1615
      %1617 = vrot.lane.b32.xlu0 %v1556, 112
      %v1618 = vpop.permute.xlu0 %1617
      %1619 = vrot.lane.b32.xlu0 %v1557, 112
      %v1620 = vpop.permute.xlu0 %1619
      %1621 = vrot.lane.b32.xlu0 %v1558, 112
      %v1622 = vpop.permute.xlu0 %1621
      %1623 = vrot.lane.b32.xlu0 %v1559, 112
      %v1624 = vpop.permute.xlu0 %1623
      %s1641 = scalar_lea.vmem %s192, 16
      %1642 = vst.msk [vmem:[%s1641] sm:$0xff] %vm1560, %v1594
      %1643 = vst.msk [vmem:[%s1641 + $0x8] sm:$0xff] %vm1560, %v1596
      %1644 = vst.msk [vmem:[%s1641 + $0x20] sm:$0xff] %vm1560, %v1598
      %1645 = vst.msk [vmem:[%s1641 + $0x28] sm:$0xff] %vm1560, %v1600
      %1646 = vst.msk [vmem:[%s1641 + $0x40] sm:$0xff] %vm1560, %v1602
      %1647 = vst.msk [vmem:[%s1641 + $0x48] sm:$0xff] %vm1560, %v1604
      %1648 = vst.msk [vmem:[%s1641 + $0x60] sm:$0xff] %vm1560, %v1606
      %1649 = vst.msk [vmem:[%s1641 + $0x68] sm:$0xff] %vm1560, %v1608
      %1650 = vst.msk [vmem:[%s1641 + $0x80] sm:$0xff] %vm1560, %v1610
      %1651 = vst.msk [vmem:[%s1641 + $0x88] sm:$0xff] %vm1560, %v1612
      %1652 = vst.msk [vmem:[%s1641 + $0xa0] sm:$0xff] %vm1560, %v1614
      %1653 = vst.msk [vmem:[%s1641 + $0xa8] sm:$0xff] %vm1560, %v1616
      %1654 = vst.msk [vmem:[%s1641 + $0xc0] sm:$0xff] %vm1560, %v1618
      %1655 = vst.msk [vmem:[%s1641 + $0xc8] sm:$0xff] %vm1560, %v1620
      %1656 = vst.msk [vmem:[%s1641 + $0xe0] sm:$0xff] %vm1560, %v1622
      %1657 = vst.msk [vmem:[%s1641 + $0xe8] sm:$0xff] %vm1560, %v1624
      %s1658 = smul.u32 %s18, 2
      %s1659 = sadd.s32 %s1658, %s19
      %s1660 = smul.u32 8, %s1659
      %p1661 = scmp.lt.s32.totalorder %s1660, 31
      %s1662 = scalar_select %p1661, %s1660, 31
      %s1663 = smul.addr %s1662, 4
      %s1664 = smul.addr %s1663, 8
      %s1665 = scalar_lea.vmem %s3, %s1664
      // Predicated region
      $region33: #{up_conv_forward.1} parent=31 // pred_check
        %p1666 = pneg %p116
      $region34: #{up_conv_forward.1} parent=31 // pred_check_branch
        %1668 = sbr.rel (%p1666) target = $region36
      $region35: #{up_conv_forward.1} parent=31 // pred_region
        %s1669 = smul.u32 %s18, 2
        %s1670 = sadd.s32 %s1669, %s19
        %s1671 = smul.u32 8, %s1670
      $region36: #{up_conv_forward.1} parent=31 // pred_fallthru
        _
    $region32: #{up_conv_forward.1} parent=5 // pred_fallthru
      _
    %p1672 = scmp.le.s32.totalorder 2, %s9
    // Predicated region
    $region37: #{up_conv_forward.1} parent=5 // pred_check
      %p1673 = pneg %p1672
    $region38: #{up_conv_forward.1} parent=5 // pred_check_branch
      %1675 = sbr.rel (%p1673) target = $region40
    $region39: #{up_conv_forward.1} parent=5 // pred_region
      %s1676 = ssub.s32 %s9, 2
      // Predicated region
      $region41: #{up_conv_forward.1} parent=39 // pred_check
        %p1677 = pneg %p122
      $region42: #{up_conv_forward.1} parent=39 // pred_check_branch
        %1679 = sbr.rel (%p1677) target = $region44
      $region43: #{up_conv_forward.1} parent=39 // pred_region
        %s1680 = smul.u32 %s20, 2
        %s1681 = sadd.s32 %s1680, %s21
        %s1682 = smul.u32 8, %s1681
        %p1683 = scmp.lt.s32.totalorder %s1682, 31
        %s1684 = scalar_select %p1683, %s1682, 31
        %s1685 = smul.addr %s1684, 4
        %s1686 = smul.addr %s1685, 8
        %s1687 = scalar_lea.vmem %s3, %s1686
      $region44: #{up_conv_forward.1} parent=39 // pred_fallthru
        _
    $region40: #{up_conv_forward.1} parent=5 // pred_fallthru
      _
  $region6: #{up_conv_forward.1} parent=0 // loop_footer
    %s13 = sadd.s32 1, %s9
  $region7: #{up_conv_forward.1} parent=0 // loop_footer_branch
    %8 = sbr.rel target = $region3
  $region8: #{up_conv_forward.1} parent=0 // loop_exit
    _

</llo_original>
